<compile_context>
chip_gen: v7x
topology: tpu7x:2x2x1
jax: 0.10.0
libtpu: 0.0.40
codegen_flags: <defaults>
</compile_context>

<pallas_src>
import functools

import numpy as np
import jax
import jax.numpy as jnp
from jax import lax
from jax.experimental import pallas as pl
from jax.experimental.pallas import tpu as pltpu

KS = 7                      # conv kernel size
PAD = (KS - 1) // 2         # = 3


def spatial_gate_kernel(w_ref, bn_ref, mask_ref, x_ref, o_ref, pad_ref, *, W):
    # w_ref   : SMEM f32[2*7*7]  flattened conv weight, layout [c, kh, kw].
    # bn_ref  : SMEM f32[2]      [bn_scale, bn_bias] (BatchNorm folded).
    # mask_ref: VMEM f32[7, H*W] per-kw column-validity masks (0/1).
    # x_ref   : VMEM [1, C, H*W] input block (native dtype).
    # o_ref   : VMEM [1, C, H*W] output block.
    # pad_ref : VMEM f32[2, H*W + 2*(PAD*W + PAD)] zero-padded pooled maps.
    x = x_ref[0]                                   # (C, HW), native dtype
    C, HW = x.shape
    OFF = PAD * W + PAD                            # start of real data in pad_ref

    # ---- ChannelPool: max and mean over the channel axis (lane-dense) ----
    pmax = jnp.max(x, axis=0, keepdims=True).astype(jnp.float32)          # (1, HW)
    pmean = jnp.sum(x.astype(jnp.float32), axis=0, keepdims=True) * (1.0 / C)

    # ---- Zero-padded pooled maps in VMEM scratch (flat, row stride = W) ----
    # Zeroed every step (scratch may be core-local under megacore sharding,
    # so do not gate this on program_id). Cost is a few KB of VMEM writes.
    pad_ref[...] = jnp.zeros_like(pad_ref)
    pad_ref[0:1, OFF:OFF + HW] = pmax
    pad_ref[1:2, OFF:OFF + HW] = pmean

    # ---- 7x7 conv as shifted-slice accumulation (pure VPU FMAs) ----
    # out[h,w] = sum_{c,kh,kw} w[c,kh,kw] * pooled[c, h+kh-3, w+kw-3]
    # Flat index shift = (kh-3)*W + (kw-3); vertical out-of-range taps land in
    # the zero padding, horizontal wrap-around is killed by the per-kw mask.
    acc = jnp.zeros((1, HW), jnp.float32)
    for kw in range(KS):
        partial = jnp.zeros((1, HW), jnp.float32)
        for kh in range(KS):
            start = OFF + (kh - PAD) * W + (kw - PAD)
            for c in range(2):
                wt = w_ref[c * KS * KS + kh * KS + kw]
                partial = partial + wt * pad_ref[c:c + 1, start:start + HW]
        if kw == PAD:
            acc = acc + partial                    # center column: mask is all-ones
        else:
            acc = acc + mask_ref[kw:kw + 1, :] * partial

    # ---- BatchNorm (folded affine) + sigmoid gate + apply ----
    gate = jax.nn.sigmoid(acc * bn_ref[0] + bn_ref[1])                    # (1, HW) f32
    o_ref[0] = (x * gate.astype(x.dtype)).astype(o_ref.dtype)


def spatial_gate(x, conv_w, gamma, beta, run_mean, run_var, eps=1e-5):
    """x: (N, C, H, W); conv_w: (1, 2, 7, 7); BN params are scalars."""
    N, C, H, W = x.shape
    HW = H * W
    OFF = PAD * W + PAD
    L = HW + 2 * OFF                               # padded flat length per channel

    # Fold BatchNorm (eval mode) into scale/bias.
    bn_scale = gamma / jnp.sqrt(run_var + eps)
    bn_bias = beta - run_mean * bn_scale
    bn = jnp.stack([bn_scale, bn_bias]).reshape(2).astype(jnp.float32)
    w_flat = conv_w.reshape(-1).astype(jnp.float32)                       # (98,)

    # Per-kw column-validity masks (pure shape constants, built with numpy).
    col = np.arange(HW) % W
    masks_np = np.zeros((KS, HW), np.float32)
    for kw in range(KS):
        cc = col + (kw - PAD)
        masks_np[kw] = ((cc >= 0) & (cc < W)).astype(np.float32)
    masks = jnp.asarray(masks_np)

    # Lane-dense view of x: trailing dim H*W (multiple of 128 here).
    x_flat = x.reshape(N, C, HW)

    block_bytes = C * HW * x.dtype.itemsize
    vmem_limit = int(min(64 * 1024 * 1024,
                         max(16 * 1024 * 1024,
                             4 * block_bytes + 2 * KS * HW * 4 + 2 * L * 4 + (2 << 20))))

    out_flat = pl.pallas_call(
        functools.partial(spatial_gate_kernel, W=W),
        out_shape=jax.ShapeDtypeStruct((N, C, HW), x.dtype),
        grid=(N,),
        in_specs=[
            pl.BlockSpec(memory_space=pltpu.MemorySpace.SMEM),   # conv weights
            pl.BlockSpec(memory_space=pltpu.MemorySpace.SMEM),   # bn scale/bias
            pl.BlockSpec((KS, HW), lambda n: (0, 0)),            # column masks
            pl.BlockSpec((1, C, HW), lambda n: (n, 0, 0)),       # x
        ],
        out_specs=pl.BlockSpec((1, C, HW), lambda n: (n, 0, 0)),
        scratch_shapes=[pltpu.VMEM((2, L), jnp.float32)],
        compiler_params=pltpu.CompilerParams(
            dimension_semantics=("parallel",),
            vmem_limit_bytes=vmem_limit),
    )(w_flat, bn, masks, x_flat)
    return out_flat.reshape(N, C, H, W)


def spatial_gate_reference(x, conv_w, gamma, beta, run_mean, run_var, eps=1e-5):
    pooled = jnp.stack([jnp.max(x, axis=1), jnp.mean(x, axis=1)], axis=1)
    conv = lax.conv_general_dilated(
        pooled, conv_w, window_strides=(1, 1),
        padding=[(PAD, PAD), (PAD, PAD)],
        dimension_numbers=("NCHW", "OIHW", "NCHW"))
    bn = (conv - run_mean) / jnp.sqrt(run_var + eps) * gamma + beta
    return x * jax.nn.sigmoid(bn)


if __name__ == "__main__":
    key = jax.random.PRNGKey(0)
    kx, kw = jax.random.split(key)

    N, C, H, W = 2, 4, 16, 16
    x = jax.random.normal(kx, (N, C, H, W), dtype=jnp.float32)

    # Deterministic synthetic parameters (BatchNorm in eval mode).
    fan_in = 2 * KS * KS
    conv_w = jax.random.normal(kw, (1, 2, KS, KS), dtype=jnp.float32) / np.sqrt(fan_in)
    gamma = jnp.float32(0.9)
    beta = jnp.float32(0.1)
    run_mean = jnp.float32(0.05)
    run_var = jnp.float32(1.2)

    out = spatial_gate(x, conv_w, gamma, beta, run_mean, run_var)
    out = jax.block_until_ready(out)

    ref = spatial_gate_reference(x, conv_w, gamma, beta, run_mean, run_var)
    assert out.shape == x.shape and out.dtype == x.dtype
    assert np.allclose(np.asarray(out), np.asarray(ref), atol=1e-4, rtol=1e-4), (
        np.max(np.abs(np.asarray(out) - np.asarray(ref))))

    print("KERNEL_OK")
</pallas_src>

<mosaic_0001>
module attributes {stable_mosaic.version = 11 : i64} {
  func.func @spatial_gate_kernel(%arg0: i32, %arg1: memref<98xf32, #tpu.memory_space<smem>>, %arg2: memref<2xf32, #tpu.memory_space<smem>>, %arg3: memref<7x256xf32, #tpu.memory_space<vmem>>, %arg4: memref<1x4x256xf32, #tpu.memory_space<vmem>>, %arg5: memref<1x4x256xf32, #tpu.memory_space<vmem>>, %arg6: memref<2x358xf32, #tpu.memory_space<vmem>>) attributes {dimension_semantics = [#tpu.dimension_semantics<parallel>], iteration_bounds = array<i64: 2>, scalar_prefetch = 0 : i64, scratch_operands = 1 : i64, tpu.core_type = #tpu.core_type<tc>, window_params = [{transform_indices = @transform_0, window_bounds = array<i64: 98>}, {transform_indices = @transform_1, window_bounds = array<i64: 2>}, {pipeline_mode = #tpu.pipeline_mode<synchronous>, transform_indices = @transform_2, window_bounds = array<i64: 7, 256>}, {transform_indices = @transform_3, window_bounds = array<i64: 1, 4, 256>}, {transform_indices = @transform_4, window_bounds = array<i64: 1, 4, 256>}]} {
    %c0 = arith.constant 0 : index
    %c0_0 = arith.constant 0 : index
    %c0_1 = arith.constant 0 : index
    %0 = vector.load %arg4[%c0, %c0_0, %c0_1] : memref<1x4x256xf32, #tpu.memory_space<vmem>>, vector<1x4x256xf32>
    %1 = vector.shape_cast %0 : vector<1x4x256xf32> to vector<4x256xf32>
    %cst = arith.constant dense<0xFF800000> : vector<256xf32>
    %2 = vector.multi_reduction <maximumf>, %1, %cst [0] : vector<4x256xf32> to vector<256xf32>
    %3 = vector.shape_cast %2 : vector<256xf32> to vector<1x256xf32>
    %cst_2 = arith.constant dense<0.000000e+00> : vector<256xf32>
    %4 = vector.multi_reduction <add>, %1, %cst_2 [0] : vector<4x256xf32> to vector<256xf32>
    %5 = vector.shape_cast %4 : vector<256xf32> to vector<1x256xf32>
    %cst_3 = arith.constant 2.500000e-01 : f32
    %6 = vector.broadcast %cst_3 : f32 to vector<1x256xf32>
    %7 = arith.mulf %5, %6 : vector<1x256xf32>
    %cst_4 = arith.constant 0.000000e+00 : f32
    %8 = vector.broadcast %cst_4 : f32 to vector<2x358xf32>
    %c0_5 = arith.constant 0 : index
    %c0_6 = arith.constant 0 : index
    %9 = vector.load %arg6[%c0_5, %c0_6] : memref<2x358xf32, #tpu.memory_space<vmem>>, vector<2x358xf32>
    tpu.vector_store %arg6[%c0_5, %c0_6], %8 {strides = array<i32>} : memref<2x358xf32, #tpu.memory_space<vmem>>, vector<2x358xf32>,
    %c0_7 = arith.constant 0 : index
    %c51 = arith.constant 51 : index
    %10 = vector.load %arg6[%c0_7, %c51] : memref<2x358xf32, #tpu.memory_space<vmem>>, vector<1x256xf32>
    tpu.vector_store %arg6[%c0_7, %c51], %3 {strides = array<i32>} : memref<2x358xf32, #tpu.memory_space<vmem>>, vector<1x256xf32>,
    %c1 = arith.constant 1 : index
    %c51_8 = arith.constant 51 : index
    %11 = vector.load %arg6[%c1, %c51_8] : memref<2x358xf32, #tpu.memory_space<vmem>>, vector<1x256xf32>
    tpu.vector_store %arg6[%c1, %c51_8], %7 {strides = array<i32>} : memref<2x358xf32, #tpu.memory_space<vmem>>, vector<1x256xf32>,
    %cst_9 = arith.constant 0.000000e+00 : f32
    %12 = vector.broadcast %cst_9 : f32 to vector<1x256xf32>
    %cst_10 = arith.constant 0.000000e+00 : f32
    %13 = vector.broadcast %cst_10 : f32 to vector<1x256xf32>
    %c0_11 = arith.constant 0 : index
    %14 = memref.load %arg1[%c0_11] : memref<98xf32, #tpu.memory_space<smem>>
    %c0_12 = arith.constant 0 : index
    %c0_13 = arith.constant 0 : index
    %15 = vector.load %arg6[%c0_12, %c0_13] : memref<2x358xf32, #tpu.memory_space<vmem>>, vector<1x256xf32>
    %16 = vector.broadcast %14 : f32 to vector<1x256xf32>
    %17 = arith.mulf %16, %15 : vector<1x256xf32>
    %18 = arith.addf %13, %17 : vector<1x256xf32>
    %c49 = arith.constant 49 : index
    %19 = memref.load %arg1[%c49] : memref<98xf32, #tpu.memory_space<smem>>
    %c1_14 = arith.constant 1 : index
    %c0_15 = arith.constant 0 : index
    %20 = vector.load %arg6[%c1_14, %c0_15] : memref<2x358xf32, #tpu.memory_space<vmem>>, vector<1x256xf32>
    %21 = vector.broadcast %19 : f32 to vector<1x256xf32>
    %22 = arith.mulf %21, %20 : vector<1x256xf32>
    %23 = arith.addf %18, %22 : vector<1x256xf32>
    %c7 = arith.constant 7 : index
    %24 = memref.load %arg1[%c7] : memref<98xf32, #tpu.memory_space<smem>>
    %c0_16 = arith.constant 0 : index
    %c16 = arith.constant 16 : index
    %25 = vector.load %arg6[%c0_16, %c16] : memref<2x358xf32, #tpu.memory_space<vmem>>, vector<1x256xf32>
    %26 = vector.broadcast %24 : f32 to vector<1x256xf32>
    %27 = arith.mulf %26, %25 : vector<1x256xf32>
    %28 = arith.addf %23, %27 : vector<1x256xf32>
    %c56 = arith.constant 56 : index
    %29 = memref.load %arg1[%c56] : memref<98xf32, #tpu.memory_space<smem>>
    %c1_17 = arith.constant 1 : index
    %c16_18 = arith.constant 16 : index
    %30 = vector.load %arg6[%c1_17, %c16_18] : memref<2x358xf32, #tpu.memory_space<vmem>>, vector<1x256xf32>
    %31 = vector.broadcast %29 : f32 to vector<1x256xf32>
    %32 = arith.mulf %31, %30 : vector<1x256xf32>
    %33 = arith.addf %28, %32 : vector<1x256xf32>
    %c14 = arith.constant 14 : index
    %34 = memref.load %arg1[%c14] : memref<98xf32, #tpu.memory_space<smem>>
    %c0_19 = arith.constant 0 : index
    %c32 = arith.constant 32 : index
    %35 = vector.load %arg6[%c0_19, %c32] : memref<2x358xf32, #tpu.memory_space<vmem>>, vector<1x256xf32>
    %36 = vector.broadcast %34 : f32 to vector<1x256xf32>
    %37 = arith.mulf %36, %35 : vector<1x256xf32>
    %38 = arith.addf %33, %37 : vector<1x256xf32>
    %c63 = arith.constant 63 : index
    %39 = memref.load %arg1[%c63] : memref<98xf32, #tpu.memory_space<smem>>
    %c1_20 = arith.constant 1 : index
    %c32_21 = arith.constant 32 : index
    %40 = vector.load %arg6[%c1_20, %c32_21] : memref<2x358xf32, #tpu.memory_space<vmem>>, vector<1x256xf32>
    %41 = vector.broadcast %39 : f32 to vector<1x256xf32>
    %42 = arith.mulf %41, %40 : vector<1x256xf32>
    %43 = arith.addf %38, %42 : vector<1x256xf32>
    %c21 = arith.constant 21 : index
    %44 = memref.load %arg1[%c21] : memref<98xf32, #tpu.memory_space<smem>>
    %c0_22 = arith.constant 0 : index
    %c48 = arith.constant 48 : index
    %45 = vector.load %arg6[%c0_22, %c48] : memref<2x358xf32, #tpu.memory_space<vmem>>, vector<1x256xf32>
    %46 = vector.broadcast %44 : f32 to vector<1x256xf32>
    %47 = arith.mulf %46, %45 : vector<1x256xf32>
    %48 = arith.addf %43, %47 : vector<1x256xf32>
    %c70 = arith.constant 70 : index
    %49 = memref.load %arg1[%c70] : memref<98xf32, #tpu.memory_space<smem>>
    %c1_23 = arith.constant 1 : index
    %c48_24 = arith.constant 48 : index
    %50 = vector.load %arg6[%c1_23, %c48_24] : memref<2x358xf32, #tpu.memory_space<vmem>>, vector<1x256xf32>
    %51 = vector.broadcast %49 : f32 to vector<1x256xf32>
    %52 = arith.mulf %51, %50 : vector<1x256xf32>
    %53 = arith.addf %48, %52 : vector<1x256xf32>
    %c28 = arith.constant 28 : index
    %54 = memref.load %arg1[%c28] : memref<98xf32, #tpu.memory_space<smem>>
    %c0_25 = arith.constant 0 : index
    %c64 = arith.constant 64 : index
    %55 = vector.load %arg6[%c0_25, %c64] : memref<2x358xf32, #tpu.memory_space<vmem>>, vector<1x256xf32>
    %56 = vector.broadcast %54 : f32 to vector<1x256xf32>
    %57 = arith.mulf %56, %55 : vector<1x256xf32>
    %58 = arith.addf %53, %57 : vector<1x256xf32>
    %c77 = arith.constant 77 : index
    %59 = memref.load %arg1[%c77] : memref<98xf32, #tpu.memory_space<smem>>
    %c1_26 = arith.constant 1 : index
    %c64_27 = arith.constant 64 : index
    %60 = vector.load %arg6[%c1_26, %c64_27] : memref<2x358xf32, #tpu.memory_space<vmem>>, vector<1x256xf32>
    %61 = vector.broadcast %59 : f32 to vector<1x256xf32>
    %62 = arith.mulf %61, %60 : vector<1x256xf32>
    %63 = arith.addf %58, %62 : vector<1x256xf32>
    %c35 = arith.constant 35 : index
    %64 = memref.load %arg1[%c35] : memref<98xf32, #tpu.memory_space<smem>>
    %c0_28 = arith.constant 0 : index
    %c80 = arith.constant 80 : index
    %65 = vector.load %arg6[%c0_28, %c80] : memref<2x358xf32, #tpu.memory_space<vmem>>, vector<1x256xf32>
    %66 = vector.broadcast %64 : f32 to vector<1x256xf32>
    %67 = arith.mulf %66, %65 : vector<1x256xf32>
    %68 = arith.addf %63, %67 : vector<1x256xf32>
    %c84 = arith.constant 84 : index
    %69 = memref.load %arg1[%c84] : memref<98xf32, #tpu.memory_space<smem>>
    %c1_29 = arith.constant 1 : index
    %c80_30 = arith.constant 80 : index
    %70 = vector.load %arg6[%c1_29, %c80_30] : memref<2x358xf32, #tpu.memory_space<vmem>>, vector<1x256xf32>
    %71 = vector.broadcast %69 : f32 to vector<1x256xf32>
    %72 = arith.mulf %71, %70 : vector<1x256xf32>
    %73 = arith.addf %68, %72 : vector<1x256xf32>
    %c42 = arith.constant 42 : index
    %74 = memref.load %arg1[%c42] : memref<98xf32, #tpu.memory_space<smem>>
    %c0_31 = arith.constant 0 : index
    %c96 = arith.constant 96 : index
    %75 = vector.load %arg6[%c0_31, %c96] : memref<2x358xf32, #tpu.memory_space<vmem>>, vector<1x256xf32>
    %76 = vector.broadcast %74 : f32 to vector<1x256xf32>
    %77 = arith.mulf %76, %75 : vector<1x256xf32>
    %78 = arith.addf %73, %77 : vector<1x256xf32>
    %c91 = arith.constant 91 : index
    %79 = memref.load %arg1[%c91] : memref<98xf32, #tpu.memory_space<smem>>
    %c1_32 = arith.constant 1 : index
    %c96_33 = arith.constant 96 : index
    %80 = vector.load %arg6[%c1_32, %c96_33] : memref<2x358xf32, #tpu.memory_space<vmem>>, vector<1x256xf32>
    %81 = vector.broadcast %79 : f32 to vector<1x256xf32>
    %82 = arith.mulf %81, %80 : vector<1x256xf32>
    %83 = arith.addf %78, %82 : vector<1x256xf32>
    %c0_34 = arith.constant 0 : index
    %c0_35 = arith.constant 0 : index
    %84 = vector.load %arg3[%c0_34, %c0_35] : memref<7x256xf32, #tpu.memory_space<vmem>>, vector<1x256xf32>
    %85 = arith.mulf %84, %83 : vector<1x256xf32>
    %86 = arith.addf %12, %85 : vector<1x256xf32>
    %cst_36 = arith.constant 0.000000e+00 : f32
    %87 = vector.broadcast %cst_36 : f32 to vector<1x256xf32>
    %c1_37 = arith.constant 1 : index
    %88 = memref.load %arg1[%c1_37] : memref<98xf32, #tpu.memory_space<smem>>
    %c0_38 = arith.constant 0 : index
    %c1_39 = arith.constant 1 : index
    %89 = vector.load %arg6[%c0_38, %c1_39] : memref<2x358xf32, #tpu.memory_space<vmem>>, vector<1x256xf32>
    %90 = vector.broadcast %88 : f32 to vector<1x256xf32>
    %91 = arith.mulf %90, %89 : vector<1x256xf32>
    %92 = arith.addf %87, %91 : vector<1x256xf32>
    %c50 = arith.constant 50 : index
    %93 = memref.load %arg1[%c50] : memref<98xf32, #tpu.memory_space<smem>>
    %c1_40 = arith.constant 1 : index
    %c1_41 = arith.constant 1 : index
    %94 = vector.load %arg6[%c1_40, %c1_41] : memref<2x358xf32, #tpu.memory_space<vmem>>, vector<1x256xf32>
    %95 = vector.broadcast %93 : f32 to vector<1x256xf32>
    %96 = arith.mulf %95, %94 : vector<1x256xf32>
    %97 = arith.addf %92, %96 : vector<1x256xf32>
    %c8 = arith.constant 8 : index
    %98 = memref.load %arg1[%c8] : memref<98xf32, #tpu.memory_space<smem>>
    %c0_42 = arith.constant 0 : index
    %c17 = arith.constant 17 : index
    %99 = vector.load %arg6[%c0_42, %c17] : memref<2x358xf32, #tpu.memory_space<vmem>>, vector<1x256xf32>
    %100 = vector.broadcast %98 : f32 to vector<1x256xf32>
    %101 = arith.mulf %100, %99 : vector<1x256xf32>
    %102 = arith.addf %97, %101 : vector<1x256xf32>
    %c57 = arith.constant 57 : index
    %103 = memref.load %arg1[%c57] : memref<98xf32, #tpu.memory_space<smem>>
    %c1_43 = arith.constant 1 : index
    %c17_44 = arith.constant 17 : index
    %104 = vector.load %arg6[%c1_43, %c17_44] : memref<2x358xf32, #tpu.memory_space<vmem>>, vector<1x256xf32>
    %105 = vector.broadcast %103 : f32 to vector<1x256xf32>
    %106 = arith.mulf %105, %104 : vector<1x256xf32>
    %107 = arith.addf %102, %106 : vector<1x256xf32>
    %c15 = arith.constant 15 : index
    %108 = memref.load %arg1[%c15] : memref<98xf32, #tpu.memory_space<smem>>
    %c0_45 = arith.constant 0 : index
    %c33 = arith.constant 33 : index
    %109 = vector.load %arg6[%c0_45, %c33] : memref<2x358xf32, #tpu.memory_space<vmem>>, vector<1x256xf32>
    %110 = vector.broadcast %108 : f32 to vector<1x256xf32>
    %111 = arith.mulf %110, %109 : vector<1x256xf32>
    %112 = arith.addf %107, %111 : vector<1x256xf32>
    %c64_46 = arith.constant 64 : index
    %113 = memref.load %arg1[%c64_46] : memref<98xf32, #tpu.memory_space<smem>>
    %c1_47 = arith.constant 1 : index
    %c33_48 = arith.constant 33 : index
    %114 = vector.load %arg6[%c1_47, %c33_48] : memref<2x358xf32, #tpu.memory_space<vmem>>, vector<1x256xf32>
    %115 = vector.broadcast %113 : f32 to vector<1x256xf32>
    %116 = arith.mulf %115, %114 : vector<1x256xf32>
    %117 = arith.addf %112, %116 : vector<1x256xf32>
    %c22 = arith.constant 22 : index
    %118 = memref.load %arg1[%c22] : memref<98xf32, #tpu.memory_space<smem>>
    %c0_49 = arith.constant 0 : index
    %c49_50 = arith.constant 49 : index
    %119 = vector.load %arg6[%c0_49, %c49_50] : memref<2x358xf32, #tpu.memory_space<vmem>>, vector<1x256xf32>
    %120 = vector.broadcast %118 : f32 to vector<1x256xf32>
    %121 = arith.mulf %120, %119 : vector<1x256xf32>
    %122 = arith.addf %117, %121 : vector<1x256xf32>
    %c71 = arith.constant 71 : index
    %123 = memref.load %arg1[%c71] : memref<98xf32, #tpu.memory_space<smem>>
    %c1_51 = arith.constant 1 : index
    %c49_52 = arith.constant 49 : index
    %124 = vector.load %arg6[%c1_51, %c49_52] : memref<2x358xf32, #tpu.memory_space<vmem>>, vector<1x256xf32>
    %125 = vector.broadcast %123 : f32 to vector<1x256xf32>
    %126 = arith.mulf %125, %124 : vector<1x256xf32>
    %127 = arith.addf %122, %126 : vector<1x256xf32>
    %c29 = arith.constant 29 : index
    %128 = memref.load %arg1[%c29] : memref<98xf32, #tpu.memory_space<smem>>
    %c0_53 = arith.constant 0 : index
    %c65 = arith.constant 65 : index
    %129 = vector.load %arg6[%c0_53, %c65] : memref<2x358xf32, #tpu.memory_space<vmem>>, vector<1x256xf32>
    %130 = vector.broadcast %128 : f32 to vector<1x256xf32>
    %131 = arith.mulf %130, %129 : vector<1x256xf32>
    %132 = arith.addf %127, %131 : vector<1x256xf32>
    %c78 = arith.constant 78 : index
    %133 = memref.load %arg1[%c78] : memref<98xf32, #tpu.memory_space<smem>>
    %c1_54 = arith.constant 1 : index
    %c65_55 = arith.constant 65 : index
    %134 = vector.load %arg6[%c1_54, %c65_55] : memref<2x358xf32, #tpu.memory_space<vmem>>, vector<1x256xf32>
    %135 = vector.broadcast %133 : f32 to vector<1x256xf32>
    %136 = arith.mulf %135, %134 : vector<1x256xf32>
    %137 = arith.addf %132, %136 : vector<1x256xf32>
    %c36 = arith.constant 36 : index
    %138 = memref.load %arg1[%c36] : memref<98xf32, #tpu.memory_space<smem>>
    %c0_56 = arith.constant 0 : index
    %c81 = arith.constant 81 : index
    %139 = vector.load %arg6[%c0_56, %c81] : memref<2x358xf32, #tpu.memory_space<vmem>>, vector<1x256xf32>
    %140 = vector.broadcast %138 : f32 to vector<1x256xf32>
    %141 = arith.mulf %140, %139 : vector<1x256xf32>
    %142 = arith.addf %137, %141 : vector<1x256xf32>
    %c85 = arith.constant 85 : index
    %143 = memref.load %arg1[%c85] : memref<98xf32, #tpu.memory_space<smem>>
    %c1_57 = arith.constant 1 : index
    %c81_58 = arith.constant 81 : index
    %144 = vector.load %arg6[%c1_57, %c81_58] : memref<2x358xf32, #tpu.memory_space<vmem>>, vector<1x256xf32>
    %145 = vector.broadcast %143 : f32 to vector<1x256xf32>
    %146 = arith.mulf %145, %144 : vector<1x256xf32>
    %147 = arith.addf %142, %146 : vector<1x256xf32>
    %c43 = arith.constant 43 : index
    %148 = memref.load %arg1[%c43] : memref<98xf32, #tpu.memory_space<smem>>
    %c0_59 = arith.constant 0 : index
    %c97 = arith.constant 97 : index
    %149 = vector.load %arg6[%c0_59, %c97] : memref<2x358xf32, #tpu.memory_space<vmem>>, vector<1x256xf32>
    %150 = vector.broadcast %148 : f32 to vector<1x256xf32>
    %151 = arith.mulf %150, %149 : vector<1x256xf32>
    %152 = arith.addf %147, %151 : vector<1x256xf32>
    %c92 = arith.constant 92 : index
    %153 = memref.load %arg1[%c92] : memref<98xf32, #tpu.memory_space<smem>>
    %c1_60 = arith.constant 1 : index
    %c97_61 = arith.constant 97 : index
    %154 = vector.load %arg6[%c1_60, %c97_61] : memref<2x358xf32, #tpu.memory_space<vmem>>, vector<1x256xf32>
    %155 = vector.broadcast %153 : f32 to vector<1x256xf32>
    %156 = arith.mulf %155, %154 : vector<1x256xf32>
    %157 = arith.addf %152, %156 : vector<1x256xf32>
    %c1_62 = arith.constant 1 : index
    %c0_63 = arith.constant 0 : index
    %158 = vector.load %arg3[%c1_62, %c0_63] : memref<7x256xf32, #tpu.memory_space<vmem>>, vector<1x256xf32>
    %159 = arith.mulf %158, %157 : vector<1x256xf32>
    %160 = arith.addf %86, %159 : vector<1x256xf32>
    %cst_64 = arith.constant 0.000000e+00 : f32
    %161 = vector.broadcast %cst_64 : f32 to vector<1x256xf32>
    %c2 = arith.constant 2 : index
    %162 = memref.load %arg1[%c2] : memref<98xf32, #tpu.memory_space<smem>>
    %c0_65 = arith.constant 0 : index
    %c2_66 = arith.constant 2 : index
    %163 = vector.load %arg6[%c0_65, %c2_66] : memref<2x358xf32, #tpu.memory_space<vmem>>, vector<1x256xf32>
    %164 = vector.broadcast %162 : f32 to vector<1x256xf32>
    %165 = arith.mulf %164, %163 : vector<1x256xf32>
    %166 = arith.addf %161, %165 : vector<1x256xf32>
    %c51_67 = arith.constant 51 : index
    %167 = memref.load %arg1[%c51_67] : memref<98xf32, #tpu.memory_space<smem>>
    %c1_68 = arith.constant 1 : index
    %c2_69 = arith.constant 2 : index
    %168 = vector.load %arg6[%c1_68, %c2_69] : memref<2x358xf32, #tpu.memory_space<vmem>>, vector<1x256xf32>
    %169 = vector.broadcast %167 : f32 to vector<1x256xf32>
    %170 = arith.mulf %169, %168 : vector<1x256xf32>
    %171 = arith.addf %166, %170 : vector<1x256xf32>
    %c9 = arith.constant 9 : index
    %172 = memref.load %arg1[%c9] : memref<98xf32, #tpu.memory_space<smem>>
    %c0_70 = arith.constant 0 : index
    %c18 = arith.constant 18 : index
    %173 = vector.load %arg6[%c0_70, %c18] : memref<2x358xf32, #tpu.memory_space<vmem>>, vector<1x256xf32>
    %174 = vector.broadcast %172 : f32 to vector<1x256xf32>
    %175 = arith.mulf %174, %173 : vector<1x256xf32>
    %176 = arith.addf %171, %175 : vector<1x256xf32>
    %c58 = arith.constant 58 : index
    %177 = memref.load %arg1[%c58] : memref<98xf32, #tpu.memory_space<smem>>
    %c1_71 = arith.constant 1 : index
    %c18_72 = arith.constant 18 : index
    %178 = vector.load %arg6[%c1_71, %c18_72] : memref<2x358xf32, #tpu.memory_space<vmem>>, vector<1x256xf32>
    %179 = vector.broadcast %177 : f32 to vector<1x256xf32>
    %180 = arith.mulf %179, %178 : vector<1x256xf32>
    %181 = arith.addf %176, %180 : vector<1x256xf32>
    %c16_73 = arith.constant 16 : index
    %182 = memref.load %arg1[%c16_73] : memref<98xf32, #tpu.memory_space<smem>>
    %c0_74 = arith.constant 0 : index
    %c34 = arith.constant 34 : index
    %183 = vector.load %arg6[%c0_74, %c34] : memref<2x358xf32, #tpu.memory_space<vmem>>, vector<1x256xf32>
    %184 = vector.broadcast %182 : f32 to vector<1x256xf32>
    %185 = arith.mulf %184, %183 : vector<1x256xf32>
    %186 = arith.addf %181, %185 : vector<1x256xf32>
    %c65_75 = arith.constant 65 : index
    %187 = memref.load %arg1[%c65_75] : memref<98xf32, #tpu.memory_space<smem>>
    %c1_76 = arith.constant 1 : index
    %c34_77 = arith.constant 34 : index
    %188 = vector.load %arg6[%c1_76, %c34_77] : memref<2x358xf32, #tpu.memory_space<vmem>>, vector<1x256xf32>
    %189 = vector.broadcast %187 : f32 to vector<1x256xf32>
    %190 = arith.mulf %189, %188 : vector<1x256xf32>
    %191 = arith.addf %186, %190 : vector<1x256xf32>
    %c23 = arith.constant 23 : index
    %192 = memref.load %arg1[%c23] : memref<98xf32, #tpu.memory_space<smem>>
    %c0_78 = arith.constant 0 : index
    %c50_79 = arith.constant 50 : index
    %193 = vector.load %arg6[%c0_78, %c50_79] : memref<2x358xf32, #tpu.memory_space<vmem>>, vector<1x256xf32>
    %194 = vector.broadcast %192 : f32 to vector<1x256xf32>
    %195 = arith.mulf %194, %193 : vector<1x256xf32>
    %196 = arith.addf %191, %195 : vector<1x256xf32>
    %c72 = arith.constant 72 : index
    %197 = memref.load %arg1[%c72] : memref<98xf32, #tpu.memory_space<smem>>
    %c1_80 = arith.constant 1 : index
    %c50_81 = arith.constant 50 : index
    %198 = vector.load %arg6[%c1_80, %c50_81] : memref<2x358xf32, #tpu.memory_space<vmem>>, vector<1x256xf32>
    %199 = vector.broadcast %197 : f32 to vector<1x256xf32>
    %200 = arith.mulf %199, %198 : vector<1x256xf32>
    %201 = arith.addf %196, %200 : vector<1x256xf32>
    %c30 = arith.constant 30 : index
    %202 = memref.load %arg1[%c30] : memref<98xf32, #tpu.memory_space<smem>>
    %c0_82 = arith.constant 0 : index
    %c66 = arith.constant 66 : index
    %203 = vector.load %arg6[%c0_82, %c66] : memref<2x358xf32, #tpu.memory_space<vmem>>, vector<1x256xf32>
    %204 = vector.broadcast %202 : f32 to vector<1x256xf32>
    %205 = arith.mulf %204, %203 : vector<1x256xf32>
    %206 = arith.addf %201, %205 : vector<1x256xf32>
    %c79 = arith.constant 79 : index
    %207 = memref.load %arg1[%c79] : memref<98xf32, #tpu.memory_space<smem>>
    %c1_83 = arith.constant 1 : index
    %c66_84 = arith.constant 66 : index
    %208 = vector.load %arg6[%c1_83, %c66_84] : memref<2x358xf32, #tpu.memory_space<vmem>>, vector<1x256xf32>
    %209 = vector.broadcast %207 : f32 to vector<1x256xf32>
    %210 = arith.mulf %209, %208 : vector<1x256xf32>
    %211 = arith.addf %206, %210 : vector<1x256xf32>
    %c37 = arith.constant 37 : index
    %212 = memref.load %arg1[%c37] : memref<98xf32, #tpu.memory_space<smem>>
    %c0_85 = arith.constant 0 : index
    %c82 = arith.constant 82 : index
    %213 = vector.load %arg6[%c0_85, %c82] : memref<2x358xf32, #tpu.memory_space<vmem>>, vector<1x256xf32>
    %214 = vector.broadcast %212 : f32 to vector<1x256xf32>
    %215 = arith.mulf %214, %213 : vector<1x256xf32>
    %216 = arith.addf %211, %215 : vector<1x256xf32>
    %c86 = arith.constant 86 : index
    %217 = memref.load %arg1[%c86] : memref<98xf32, #tpu.memory_space<smem>>
    %c1_86 = arith.constant 1 : index
    %c82_87 = arith.constant 82 : index
    %218 = vector.load %arg6[%c1_86, %c82_87] : memref<2x358xf32, #tpu.memory_space<vmem>>, vector<1x256xf32>
    %219 = vector.broadcast %217 : f32 to vector<1x256xf32>
    %220 = arith.mulf %219, %218 : vector<1x256xf32>
    %221 = arith.addf %216, %220 : vector<1x256xf32>
    %c44 = arith.constant 44 : index
    %222 = memref.load %arg1[%c44] : memref<98xf32, #tpu.memory_space<smem>>
    %c0_88 = arith.constant 0 : index
    %c98 = arith.constant 98 : index
    %223 = vector.load %arg6[%c0_88, %c98] : memref<2x358xf32, #tpu.memory_space<vmem>>, vector<1x256xf32>
    %224 = vector.broadcast %222 : f32 to vector<1x256xf32>
    %225 = arith.mulf %224, %223 : vector<1x256xf32>
    %226 = arith.addf %221, %225 : vector<1x256xf32>
    %c93 = arith.constant 93 : index
    %227 = memref.load %arg1[%c93] : memref<98xf32, #tpu.memory_space<smem>>
    %c1_89 = arith.constant 1 : index
    %c98_90 = arith.constant 98 : index
    %228 = vector.load %arg6[%c1_89, %c98_90] : memref<2x358xf32, #tpu.memory_space<vmem>>, vector<1x256xf32>
    %229 = vector.broadcast %227 : f32 to vector<1x256xf32>
    %230 = arith.mulf %229, %228 : vector<1x256xf32>
    %231 = arith.addf %226, %230 : vector<1x256xf32>
    %c2_91 = arith.constant 2 : index
    %c0_92 = arith.constant 0 : index
    %232 = vector.load %arg3[%c2_91, %c0_92] : memref<7x256xf32, #tpu.memory_space<vmem>>, vector<1x256xf32>
    %233 = arith.mulf %232, %231 : vector<1x256xf32>
    %234 = arith.addf %160, %233 : vector<1x256xf32>
    %cst_93 = arith.constant 0.000000e+00 : f32
    %235 = vector.broadcast %cst_93 : f32 to vector<1x256xf32>
    %c3 = arith.constant 3 : index
    %236 = memref.load %arg1[%c3] : memref<98xf32, #tpu.memory_space<smem>>
    %c0_94 = arith.constant 0 : index
    %c3_95 = arith.constant 3 : index
    %237 = vector.load %arg6[%c0_94, %c3_95] : memref<2x358xf32, #tpu.memory_space<vmem>>, vector<1x256xf32>
    %238 = vector.broadcast %236 : f32 to vector<1x256xf32>
    %239 = arith.mulf %238, %237 : vector<1x256xf32>
    %240 = arith.addf %235, %239 : vector<1x256xf32>
    %c52 = arith.constant 52 : index
    %241 = memref.load %arg1[%c52] : memref<98xf32, #tpu.memory_space<smem>>
    %c1_96 = arith.constant 1 : index
    %c3_97 = arith.constant 3 : index
    %242 = vector.load %arg6[%c1_96, %c3_97] : memref<2x358xf32, #tpu.memory_space<vmem>>, vector<1x256xf32>
    %243 = vector.broadcast %241 : f32 to vector<1x256xf32>
    %244 = arith.mulf %243, %242 : vector<1x256xf32>
    %245 = arith.addf %240, %244 : vector<1x256xf32>
    %c10 = arith.constant 10 : index
    %246 = memref.load %arg1[%c10] : memref<98xf32, #tpu.memory_space<smem>>
    %c0_98 = arith.constant 0 : index
    %c19 = arith.constant 19 : index
    %247 = vector.load %arg6[%c0_98, %c19] : memref<2x358xf32, #tpu.memory_space<vmem>>, vector<1x256xf32>
    %248 = vector.broadcast %246 : f32 to vector<1x256xf32>
    %249 = arith.mulf %248, %247 : vector<1x256xf32>
    %250 = arith.addf %245, %249 : vector<1x256xf32>
    %c59 = arith.constant 59 : index
    %251 = memref.load %arg1[%c59] : memref<98xf32, #tpu.memory_space<smem>>
    %c1_99 = arith.constant 1 : index
    %c19_100 = arith.constant 19 : index
    %252 = vector.load %arg6[%c1_99, %c19_100] : memref<2x358xf32, #tpu.memory_space<vmem>>, vector<1x256xf32>
    %253 = vector.broadcast %251 : f32 to vector<1x256xf32>
    %254 = arith.mulf %253, %252 : vector<1x256xf32>
    %255 = arith.addf %250, %254 : vector<1x256xf32>
    %c17_101 = arith.constant 17 : index
    %256 = memref.load %arg1[%c17_101] : memref<98xf32, #tpu.memory_space<smem>>
    %c0_102 = arith.constant 0 : index
    %c35_103 = arith.constant 35 : index
    %257 = vector.load %arg6[%c0_102, %c35_103] : memref<2x358xf32, #tpu.memory_space<vmem>>, vector<1x256xf32>
    %258 = vector.broadcast %256 : f32 to vector<1x256xf32>
    %259 = arith.mulf %258, %257 : vector<1x256xf32>
    %260 = arith.addf %255, %259 : vector<1x256xf32>
    %c66_104 = arith.constant 66 : index
    %261 = memref.load %arg1[%c66_104] : memref<98xf32, #tpu.memory_space<smem>>
    %c1_105 = arith.constant 1 : index
    %c35_106 = arith.constant 35 : index
    %262 = vector.load %arg6[%c1_105, %c35_106] : memref<2x358xf32, #tpu.memory_space<vmem>>, vector<1x256xf32>
    %263 = vector.broadcast %261 : f32 to vector<1x256xf32>
    %264 = arith.mulf %263, %262 : vector<1x256xf32>
    %265 = arith.addf %260, %264 : vector<1x256xf32>
    %c24 = arith.constant 24 : index
    %266 = memref.load %arg1[%c24] : memref<98xf32, #tpu.memory_space<smem>>
    %c0_107 = arith.constant 0 : index
    %c51_108 = arith.constant 51 : index
    %267 = vector.load %arg6[%c0_107, %c51_108] : memref<2x358xf32, #tpu.memory_space<vmem>>, vector<1x256xf32>
    %268 = vector.broadcast %266 : f32 to vector<1x256xf32>
    %269 = arith.mulf %268, %267 : vector<1x256xf32>
    %270 = arith.addf %265, %269 : vector<1x256xf32>
    %c73 = arith.constant 73 : index
    %271 = memref.load %arg1[%c73] : memref<98xf32, #tpu.memory_space<smem>>
    %c1_109 = arith.constant 1 : index
    %c51_110 = arith.constant 51 : index
    %272 = vector.load %arg6[%c1_109, %c51_110] : memref<2x358xf32, #tpu.memory_space<vmem>>, vector<1x256xf32>
    %273 = vector.broadcast %271 : f32 to vector<1x256xf32>
    %274 = arith.mulf %273, %272 : vector<1x256xf32>
    %275 = arith.addf %270, %274 : vector<1x256xf32>
    %c31 = arith.constant 31 : index
    %276 = memref.load %arg1[%c31] : memref<98xf32, #tpu.memory_space<smem>>
    %c0_111 = arith.constant 0 : index
    %c67 = arith.constant 67 : index
    %277 = vector.load %arg6[%c0_111, %c67] : memref<2x358xf32, #tpu.memory_space<vmem>>, vector<1x256xf32>
    %278 = vector.broadcast %276 : f32 to vector<1x256xf32>
    %279 = arith.mulf %278, %277 : vector<1x256xf32>
    %280 = arith.addf %275, %279 : vector<1x256xf32>
    %c80_112 = arith.constant 80 : index
    %281 = memref.load %arg1[%c80_112] : memref<98xf32, #tpu.memory_space<smem>>
    %c1_113 = arith.constant 1 : index
    %c67_114 = arith.constant 67 : index
    %282 = vector.load %arg6[%c1_113, %c67_114] : memref<2x358xf32, #tpu.memory_space<vmem>>, vector<1x256xf32>
    %283 = vector.broadcast %281 : f32 to vector<1x256xf32>
    %284 = arith.mulf %283, %282 : vector<1x256xf32>
    %285 = arith.addf %280, %284 : vector<1x256xf32>
    %c38 = arith.constant 38 : index
    %286 = memref.load %arg1[%c38] : memref<98xf32, #tpu.memory_space<smem>>
    %c0_115 = arith.constant 0 : index
    %c83 = arith.constant 83 : index
    %287 = vector.load %arg6[%c0_115, %c83] : memref<2x358xf32, #tpu.memory_space<vmem>>, vector<1x256xf32>
    %288 = vector.broadcast %286 : f32 to vector<1x256xf32>
    %289 = arith.mulf %288, %287 : vector<1x256xf32>
    %290 = arith.addf %285, %289 : vector<1x256xf32>
    %c87 = arith.constant 87 : index
    %291 = memref.load %arg1[%c87] : memref<98xf32, #tpu.memory_space<smem>>
    %c1_116 = arith.constant 1 : index
    %c83_117 = arith.constant 83 : index
    %292 = vector.load %arg6[%c1_116, %c83_117] : memref<2x358xf32, #tpu.memory_space<vmem>>, vector<1x256xf32>
    %293 = vector.broadcast %291 : f32 to vector<1x256xf32>
    %294 = arith.mulf %293, %292 : vector<1x256xf32>
    %295 = arith.addf %290, %294 : vector<1x256xf32>
    %c45 = arith.constant 45 : index
    %296 = memref.load %arg1[%c45] : memref<98xf32, #tpu.memory_space<smem>>
    %c0_118 = arith.constant 0 : index
    %c99 = arith.constant 99 : index
    %297 = vector.load %arg6[%c0_118, %c99] : memref<2x358xf32, #tpu.memory_space<vmem>>, vector<1x256xf32>
    %298 = vector.broadcast %296 : f32 to vector<1x256xf32>
    %299 = arith.mulf %298, %297 : vector<1x256xf32>
    %300 = arith.addf %295, %299 : vector<1x256xf32>
    %c94 = arith.constant 94 : index
    %301 = memref.load %arg1[%c94] : memref<98xf32, #tpu.memory_space<smem>>
    %c1_119 = arith.constant 1 : index
    %c99_120 = arith.constant 99 : index
    %302 = vector.load %arg6[%c1_119, %c99_120] : memref<2x358xf32, #tpu.memory_space<vmem>>, vector<1x256xf32>
    %303 = vector.broadcast %301 : f32 to vector<1x256xf32>
    %304 = arith.mulf %303, %302 : vector<1x256xf32>
    %305 = arith.addf %300, %304 : vector<1x256xf32>
    %306 = arith.addf %234, %305 : vector<1x256xf32>
    %cst_121 = arith.constant 0.000000e+00 : f32
    %307 = vector.broadcast %cst_121 : f32 to vector<1x256xf32>
    %c4 = arith.constant 4 : index
    %308 = memref.load %arg1[%c4] : memref<98xf32, #tpu.memory_space<smem>>
    %c0_122 = arith.constant 0 : index
    %c4_123 = arith.constant 4 : index
    %309 = vector.load %arg6[%c0_122, %c4_123] : memref<2x358xf32, #tpu.memory_space<vmem>>, vector<1x256xf32>
    %310 = vector.broadcast %308 : f32 to vector<1x256xf32>
    %311 = arith.mulf %310, %309 : vector<1x256xf32>
    %312 = arith.addf %307, %311 : vector<1x256xf32>
    %c53 = arith.constant 53 : index
    %313 = memref.load %arg1[%c53] : memref<98xf32, #tpu.memory_space<smem>>
    %c1_124 = arith.constant 1 : index
    %c4_125 = arith.constant 4 : index
    %314 = vector.load %arg6[%c1_124, %c4_125] : memref<2x358xf32, #tpu.memory_space<vmem>>, vector<1x256xf32>
    %315 = vector.broadcast %313 : f32 to vector<1x256xf32>
    %316 = arith.mulf %315, %314 : vector<1x256xf32>
    %317 = arith.addf %312, %316 : vector<1x256xf32>
    %c11 = arith.constant 11 : index
    %318 = memref.load %arg1[%c11] : memref<98xf32, #tpu.memory_space<smem>>
    %c0_126 = arith.constant 0 : index
    %c20 = arith.constant 20 : index
    %319 = vector.load %arg6[%c0_126, %c20] : memref<2x358xf32, #tpu.memory_space<vmem>>, vector<1x256xf32>
    %320 = vector.broadcast %318 : f32 to vector<1x256xf32>
    %321 = arith.mulf %320, %319 : vector<1x256xf32>
    %322 = arith.addf %317, %321 : vector<1x256xf32>
    %c60 = arith.constant 60 : index
    %323 = memref.load %arg1[%c60] : memref<98xf32, #tpu.memory_space<smem>>
    %c1_127 = arith.constant 1 : index
    %c20_128 = arith.constant 20 : index
    %324 = vector.load %arg6[%c1_127, %c20_128] : memref<2x358xf32, #tpu.memory_space<vmem>>, vector<1x256xf32>
    %325 = vector.broadcast %323 : f32 to vector<1x256xf32>
    %326 = arith.mulf %325, %324 : vector<1x256xf32>
    %327 = arith.addf %322, %326 : vector<1x256xf32>
    %c18_129 = arith.constant 18 : index
    %328 = memref.load %arg1[%c18_129] : memref<98xf32, #tpu.memory_space<smem>>
    %c0_130 = arith.constant 0 : index
    %c36_131 = arith.constant 36 : index
    %329 = vector.load %arg6[%c0_130, %c36_131] : memref<2x358xf32, #tpu.memory_space<vmem>>, vector<1x256xf32>
    %330 = vector.broadcast %328 : f32 to vector<1x256xf32>
    %331 = arith.mulf %330, %329 : vector<1x256xf32>
    %332 = arith.addf %327, %331 : vector<1x256xf32>
    %c67_132 = arith.constant 67 : index
    %333 = memref.load %arg1[%c67_132] : memref<98xf32, #tpu.memory_space<smem>>
    %c1_133 = arith.constant 1 : index
    %c36_134 = arith.constant 36 : index
    %334 = vector.load %arg6[%c1_133, %c36_134] : memref<2x358xf32, #tpu.memory_space<vmem>>, vector<1x256xf32>
    %335 = vector.broadcast %333 : f32 to vector<1x256xf32>
    %336 = arith.mulf %335, %334 : vector<1x256xf32>
    %337 = arith.addf %332, %336 : vector<1x256xf32>
    %c25 = arith.constant 25 : index
    %338 = memref.load %arg1[%c25] : memref<98xf32, #tpu.memory_space<smem>>
    %c0_135 = arith.constant 0 : index
    %c52_136 = arith.constant 52 : index
    %339 = vector.load %arg6[%c0_135, %c52_136] : memref<2x358xf32, #tpu.memory_space<vmem>>, vector<1x256xf32>
    %340 = vector.broadcast %338 : f32 to vector<1x256xf32>
    %341 = arith.mulf %340, %339 : vector<1x256xf32>
    %342 = arith.addf %337, %341 : vector<1x256xf32>
    %c74 = arith.constant 74 : index
    %343 = memref.load %arg1[%c74] : memref<98xf32, #tpu.memory_space<smem>>
    %c1_137 = arith.constant 1 : index
    %c52_138 = arith.constant 52 : index
    %344 = vector.load %arg6[%c1_137, %c52_138] : memref<2x358xf32, #tpu.memory_space<vmem>>, vector<1x256xf32>
    %345 = vector.broadcast %343 : f32 to vector<1x256xf32>
    %346 = arith.mulf %345, %344 : vector<1x256xf32>
    %347 = arith.addf %342, %346 : vector<1x256xf32>
    %c32_139 = arith.constant 32 : index
    %348 = memref.load %arg1[%c32_139] : memref<98xf32, #tpu.memory_space<smem>>
    %c0_140 = arith.constant 0 : index
    %c68 = arith.constant 68 : index
    %349 = vector.load %arg6[%c0_140, %c68] : memref<2x358xf32, #tpu.memory_space<vmem>>, vector<1x256xf32>
    %350 = vector.broadcast %348 : f32 to vector<1x256xf32>
    %351 = arith.mulf %350, %349 : vector<1x256xf32>
    %352 = arith.addf %347, %351 : vector<1x256xf32>
    %c81_141 = arith.constant 81 : index
    %353 = memref.load %arg1[%c81_141] : memref<98xf32, #tpu.memory_space<smem>>
    %c1_142 = arith.constant 1 : index
    %c68_143 = arith.constant 68 : index
    %354 = vector.load %arg6[%c1_142, %c68_143] : memref<2x358xf32, #tpu.memory_space<vmem>>, vector<1x256xf32>
    %355 = vector.broadcast %353 : f32 to vector<1x256xf32>
    %356 = arith.mulf %355, %354 : vector<1x256xf32>
    %357 = arith.addf %352, %356 : vector<1x256xf32>
    %c39 = arith.constant 39 : index
    %358 = memref.load %arg1[%c39] : memref<98xf32, #tpu.memory_space<smem>>
    %c0_144 = arith.constant 0 : index
    %c84_145 = arith.constant 84 : index
    %359 = vector.load %arg6[%c0_144, %c84_145] : memref<2x358xf32, #tpu.memory_space<vmem>>, vector<1x256xf32>
    %360 = vector.broadcast %358 : f32 to vector<1x256xf32>
    %361 = arith.mulf %360, %359 : vector<1x256xf32>
    %362 = arith.addf %357, %361 : vector<1x256xf32>
    %c88 = arith.constant 88 : index
    %363 = memref.load %arg1[%c88] : memref<98xf32, #tpu.memory_space<smem>>
    %c1_146 = arith.constant 1 : index
    %c84_147 = arith.constant 84 : index
    %364 = vector.load %arg6[%c1_146, %c84_147] : memref<2x358xf32, #tpu.memory_space<vmem>>, vector<1x256xf32>
    %365 = vector.broadcast %363 : f32 to vector<1x256xf32>
    %366 = arith.mulf %365, %364 : vector<1x256xf32>
    %367 = arith.addf %362, %366 : vector<1x256xf32>
    %c46 = arith.constant 46 : index
    %368 = memref.load %arg1[%c46] : memref<98xf32, #tpu.memory_space<smem>>
    %c0_148 = arith.constant 0 : index
    %c100 = arith.constant 100 : index
    %369 = vector.load %arg6[%c0_148, %c100] : memref<2x358xf32, #tpu.memory_space<vmem>>, vector<1x256xf32>
    %370 = vector.broadcast %368 : f32 to vector<1x256xf32>
    %371 = arith.mulf %370, %369 : vector<1x256xf32>
    %372 = arith.addf %367, %371 : vector<1x256xf32>
    %c95 = arith.constant 95 : index
    %373 = memref.load %arg1[%c95] : memref<98xf32, #tpu.memory_space<smem>>
    %c1_149 = arith.constant 1 : index
    %c100_150 = arith.constant 100 : index
    %374 = vector.load %arg6[%c1_149, %c100_150] : memref<2x358xf32, #tpu.memory_space<vmem>>, vector<1x256xf32>
    %375 = vector.broadcast %373 : f32 to vector<1x256xf32>
    %376 = arith.mulf %375, %374 : vector<1x256xf32>
    %377 = arith.addf %372, %376 : vector<1x256xf32>
    %c4_151 = arith.constant 4 : index
    %c0_152 = arith.constant 0 : index
    %378 = vector.load %arg3[%c4_151, %c0_152] : memref<7x256xf32, #tpu.memory_space<vmem>>, vector<1x256xf32>
    %379 = arith.mulf %378, %377 : vector<1x256xf32>
    %380 = arith.addf %306, %379 : vector<1x256xf32>
    %cst_153 = arith.constant 0.000000e+00 : f32
    %381 = vector.broadcast %cst_153 : f32 to vector<1x256xf32>
    %c5 = arith.constant 5 : index
    %382 = memref.load %arg1[%c5] : memref<98xf32, #tpu.memory_space<smem>>
    %c0_154 = arith.constant 0 : index
    %c5_155 = arith.constant 5 : index
    %383 = vector.load %arg6[%c0_154, %c5_155] : memref<2x358xf32, #tpu.memory_space<vmem>>, vector<1x256xf32>
    %384 = vector.broadcast %382 : f32 to vector<1x256xf32>
    %385 = arith.mulf %384, %383 : vector<1x256xf32>
    %386 = arith.addf %381, %385 : vector<1x256xf32>
    %c54 = arith.constant 54 : index
    %387 = memref.load %arg1[%c54] : memref<98xf32, #tpu.memory_space<smem>>
    %c1_156 = arith.constant 1 : index
    %c5_157 = arith.constant 5 : index
    %388 = vector.load %arg6[%c1_156, %c5_157] : memref<2x358xf32, #tpu.memory_space<vmem>>, vector<1x256xf32>
    %389 = vector.broadcast %387 : f32 to vector<1x256xf32>
    %390 = arith.mulf %389, %388 : vector<1x256xf32>
    %391 = arith.addf %386, %390 : vector<1x256xf32>
    %c12 = arith.constant 12 : index
    %392 = memref.load %arg1[%c12] : memref<98xf32, #tpu.memory_space<smem>>
    %c0_158 = arith.constant 0 : index
    %c21_159 = arith.constant 21 : index
    %393 = vector.load %arg6[%c0_158, %c21_159] : memref<2x358xf32, #tpu.memory_space<vmem>>, vector<1x256xf32>
    %394 = vector.broadcast %392 : f32 to vector<1x256xf32>
    %395 = arith.mulf %394, %393 : vector<1x256xf32>
    %396 = arith.addf %391, %395 : vector<1x256xf32>
    %c61 = arith.constant 61 : index
    %397 = memref.load %arg1[%c61] : memref<98xf32, #tpu.memory_space<smem>>
    %c1_160 = arith.constant 1 : index
    %c21_161 = arith.constant 21 : index
    %398 = vector.load %arg6[%c1_160, %c21_161] : memref<2x358xf32, #tpu.memory_space<vmem>>, vector<1x256xf32>
    %399 = vector.broadcast %397 : f32 to vector<1x256xf32>
    %400 = arith.mulf %399, %398 : vector<1x256xf32>
    %401 = arith.addf %396, %400 : vector<1x256xf32>
    %c19_162 = arith.constant 19 : index
    %402 = memref.load %arg1[%c19_162] : memref<98xf32, #tpu.memory_space<smem>>
    %c0_163 = arith.constant 0 : index
    %c37_164 = arith.constant 37 : index
    %403 = vector.load %arg6[%c0_163, %c37_164] : memref<2x358xf32, #tpu.memory_space<vmem>>, vector<1x256xf32>
    %404 = vector.broadcast %402 : f32 to vector<1x256xf32>
    %405 = arith.mulf %404, %403 : vector<1x256xf32>
    %406 = arith.addf %401, %405 : vector<1x256xf32>
    %c68_165 = arith.constant 68 : index
    %407 = memref.load %arg1[%c68_165] : memref<98xf32, #tpu.memory_space<smem>>
    %c1_166 = arith.constant 1 : index
    %c37_167 = arith.constant 37 : index
    %408 = vector.load %arg6[%c1_166, %c37_167] : memref<2x358xf32, #tpu.memory_space<vmem>>, vector<1x256xf32>
    %409 = vector.broadcast %407 : f32 to vector<1x256xf32>
    %410 = arith.mulf %409, %408 : vector<1x256xf32>
    %411 = arith.addf %406, %410 : vector<1x256xf32>
    %c26 = arith.constant 26 : index
    %412 = memref.load %arg1[%c26] : memref<98xf32, #tpu.memory_space<smem>>
    %c0_168 = arith.constant 0 : index
    %c53_169 = arith.constant 53 : index
    %413 = vector.load %arg6[%c0_168, %c53_169] : memref<2x358xf32, #tpu.memory_space<vmem>>, vector<1x256xf32>
    %414 = vector.broadcast %412 : f32 to vector<1x256xf32>
    %415 = arith.mulf %414, %413 : vector<1x256xf32>
    %416 = arith.addf %411, %415 : vector<1x256xf32>
    %c75 = arith.constant 75 : index
    %417 = memref.load %arg1[%c75] : memref<98xf32, #tpu.memory_space<smem>>
    %c1_170 = arith.constant 1 : index
    %c53_171 = arith.constant 53 : index
    %418 = vector.load %arg6[%c1_170, %c53_171] : memref<2x358xf32, #tpu.memory_space<vmem>>, vector<1x256xf32>
    %419 = vector.broadcast %417 : f32 to vector<1x256xf32>
    %420 = arith.mulf %419, %418 : vector<1x256xf32>
    %421 = arith.addf %416, %420 : vector<1x256xf32>
    %c33_172 = arith.constant 33 : index
    %422 = memref.load %arg1[%c33_172] : memref<98xf32, #tpu.memory_space<smem>>
    %c0_173 = arith.constant 0 : index
    %c69 = arith.constant 69 : index
    %423 = vector.load %arg6[%c0_173, %c69] : memref<2x358xf32, #tpu.memory_space<vmem>>, vector<1x256xf32>
    %424 = vector.broadcast %422 : f32 to vector<1x256xf32>
    %425 = arith.mulf %424, %423 : vector<1x256xf32>
    %426 = arith.addf %421, %425 : vector<1x256xf32>
    %c82_174 = arith.constant 82 : index
    %427 = memref.load %arg1[%c82_174] : memref<98xf32, #tpu.memory_space<smem>>
    %c1_175 = arith.constant 1 : index
    %c69_176 = arith.constant 69 : index
    %428 = vector.load %arg6[%c1_175, %c69_176] : memref<2x358xf32, #tpu.memory_space<vmem>>, vector<1x256xf32>
    %429 = vector.broadcast %427 : f32 to vector<1x256xf32>
    %430 = arith.mulf %429, %428 : vector<1x256xf32>
    %431 = arith.addf %426, %430 : vector<1x256xf32>
    %c40 = arith.constant 40 : index
    %432 = memref.load %arg1[%c40] : memref<98xf32, #tpu.memory_space<smem>>
    %c0_177 = arith.constant 0 : index
    %c85_178 = arith.constant 85 : index
    %433 = vector.load %arg6[%c0_177, %c85_178] : memref<2x358xf32, #tpu.memory_space<vmem>>, vector<1x256xf32>
    %434 = vector.broadcast %432 : f32 to vector<1x256xf32>
    %435 = arith.mulf %434, %433 : vector<1x256xf32>
    %436 = arith.addf %431, %435 : vector<1x256xf32>
    %c89 = arith.constant 89 : index
    %437 = memref.load %arg1[%c89] : memref<98xf32, #tpu.memory_space<smem>>
    %c1_179 = arith.constant 1 : index
    %c85_180 = arith.constant 85 : index
    %438 = vector.load %arg6[%c1_179, %c85_180] : memref<2x358xf32, #tpu.memory_space<vmem>>, vector<1x256xf32>
    %439 = vector.broadcast %437 : f32 to vector<1x256xf32>
    %440 = arith.mulf %439, %438 : vector<1x256xf32>
    %441 = arith.addf %436, %440 : vector<1x256xf32>
    %c47 = arith.constant 47 : index
    %442 = memref.load %arg1[%c47] : memref<98xf32, #tpu.memory_space<smem>>
    %c0_181 = arith.constant 0 : index
    %c101 = arith.constant 101 : index
    %443 = vector.load %arg6[%c0_181, %c101] : memref<2x358xf32, #tpu.memory_space<vmem>>, vector<1x256xf32>
    %444 = vector.broadcast %442 : f32 to vector<1x256xf32>
    %445 = arith.mulf %444, %443 : vector<1x256xf32>
    %446 = arith.addf %441, %445 : vector<1x256xf32>
    %c96_182 = arith.constant 96 : index
    %447 = memref.load %arg1[%c96_182] : memref<98xf32, #tpu.memory_space<smem>>
    %c1_183 = arith.constant 1 : index
    %c101_184 = arith.constant 101 : index
    %448 = vector.load %arg6[%c1_183, %c101_184] : memref<2x358xf32, #tpu.memory_space<vmem>>, vector<1x256xf32>
    %449 = vector.broadcast %447 : f32 to vector<1x256xf32>
    %450 = arith.mulf %449, %448 : vector<1x256xf32>
    %451 = arith.addf %446, %450 : vector<1x256xf32>
    %c5_185 = arith.constant 5 : index
    %c0_186 = arith.constant 0 : index
    %452 = vector.load %arg3[%c5_185, %c0_186] : memref<7x256xf32, #tpu.memory_space<vmem>>, vector<1x256xf32>
    %453 = arith.mulf %452, %451 : vector<1x256xf32>
    %454 = arith.addf %380, %453 : vector<1x256xf32>
    %cst_187 = arith.constant 0.000000e+00 : f32
    %455 = vector.broadcast %cst_187 : f32 to vector<1x256xf32>
    %c6 = arith.constant 6 : index
    %456 = memref.load %arg1[%c6] : memref<98xf32, #tpu.memory_space<smem>>
    %c0_188 = arith.constant 0 : index
    %c6_189 = arith.constant 6 : index
    %457 = vector.load %arg6[%c0_188, %c6_189] : memref<2x358xf32, #tpu.memory_space<vmem>>, vector<1x256xf32>
    %458 = vector.broadcast %456 : f32 to vector<1x256xf32>
    %459 = arith.mulf %458, %457 : vector<1x256xf32>
    %460 = arith.addf %455, %459 : vector<1x256xf32>
    %c55 = arith.constant 55 : index
    %461 = memref.load %arg1[%c55] : memref<98xf32, #tpu.memory_space<smem>>
    %c1_190 = arith.constant 1 : index
    %c6_191 = arith.constant 6 : index
    %462 = vector.load %arg6[%c1_190, %c6_191] : memref<2x358xf32, #tpu.memory_space<vmem>>, vector<1x256xf32>
    %463 = vector.broadcast %461 : f32 to vector<1x256xf32>
    %464 = arith.mulf %463, %462 : vector<1x256xf32>
    %465 = arith.addf %460, %464 : vector<1x256xf32>
    %c13 = arith.constant 13 : index
    %466 = memref.load %arg1[%c13] : memref<98xf32, #tpu.memory_space<smem>>
    %c0_192 = arith.constant 0 : index
    %c22_193 = arith.constant 22 : index
    %467 = vector.load %arg6[%c0_192, %c22_193] : memref<2x358xf32, #tpu.memory_space<vmem>>, vector<1x256xf32>
    %468 = vector.broadcast %466 : f32 to vector<1x256xf32>
    %469 = arith.mulf %468, %467 : vector<1x256xf32>
    %470 = arith.addf %465, %469 : vector<1x256xf32>
    %c62 = arith.constant 62 : index
    %471 = memref.load %arg1[%c62] : memref<98xf32, #tpu.memory_space<smem>>
    %c1_194 = arith.constant 1 : index
    %c22_195 = arith.constant 22 : index
    %472 = vector.load %arg6[%c1_194, %c22_195] : memref<2x358xf32, #tpu.memory_space<vmem>>, vector<1x256xf32>
    %473 = vector.broadcast %471 : f32 to vector<1x256xf32>
    %474 = arith.mulf %473, %472 : vector<1x256xf32>
    %475 = arith.addf %470, %474 : vector<1x256xf32>
    %c20_196 = arith.constant 20 : index
    %476 = memref.load %arg1[%c20_196] : memref<98xf32, #tpu.memory_space<smem>>
    %c0_197 = arith.constant 0 : index
    %c38_198 = arith.constant 38 : index
    %477 = vector.load %arg6[%c0_197, %c38_198] : memref<2x358xf32, #tpu.memory_space<vmem>>, vector<1x256xf32>
    %478 = vector.broadcast %476 : f32 to vector<1x256xf32>
    %479 = arith.mulf %478, %477 : vector<1x256xf32>
    %480 = arith.addf %475, %479 : vector<1x256xf32>
    %c69_199 = arith.constant 69 : index
    %481 = memref.load %arg1[%c69_199] : memref<98xf32, #tpu.memory_space<smem>>
    %c1_200 = arith.constant 1 : index
    %c38_201 = arith.constant 38 : index
    %482 = vector.load %arg6[%c1_200, %c38_201] : memref<2x358xf32, #tpu.memory_space<vmem>>, vector<1x256xf32>
    %483 = vector.broadcast %481 : f32 to vector<1x256xf32>
    %484 = arith.mulf %483, %482 : vector<1x256xf32>
    %485 = arith.addf %480, %484 : vector<1x256xf32>
    %c27 = arith.constant 27 : index
    %486 = memref.load %arg1[%c27] : memref<98xf32, #tpu.memory_space<smem>>
    %c0_202 = arith.constant 0 : index
    %c54_203 = arith.constant 54 : index
    %487 = vector.load %arg6[%c0_202, %c54_203] : memref<2x358xf32, #tpu.memory_space<vmem>>, vector<1x256xf32>
    %488 = vector.broadcast %486 : f32 to vector<1x256xf32>
    %489 = arith.mulf %488, %487 : vector<1x256xf32>
    %490 = arith.addf %485, %489 : vector<1x256xf32>
    %c76 = arith.constant 76 : index
    %491 = memref.load %arg1[%c76] : memref<98xf32, #tpu.memory_space<smem>>
    %c1_204 = arith.constant 1 : index
    %c54_205 = arith.constant 54 : index
    %492 = vector.load %arg6[%c1_204, %c54_205] : memref<2x358xf32, #tpu.memory_space<vmem>>, vector<1x256xf32>
    %493 = vector.broadcast %491 : f32 to vector<1x256xf32>
    %494 = arith.mulf %493, %492 : vector<1x256xf32>
    %495 = arith.addf %490, %494 : vector<1x256xf32>
    %c34_206 = arith.constant 34 : index
    %496 = memref.load %arg1[%c34_206] : memref<98xf32, #tpu.memory_space<smem>>
    %c0_207 = arith.constant 0 : index
    %c70_208 = arith.constant 70 : index
    %497 = vector.load %arg6[%c0_207, %c70_208] : memref<2x358xf32, #tpu.memory_space<vmem>>, vector<1x256xf32>
    %498 = vector.broadcast %496 : f32 to vector<1x256xf32>
    %499 = arith.mulf %498, %497 : vector<1x256xf32>
    %500 = arith.addf %495, %499 : vector<1x256xf32>
    %c83_209 = arith.constant 83 : index
    %501 = memref.load %arg1[%c83_209] : memref<98xf32, #tpu.memory_space<smem>>
    %c1_210 = arith.constant 1 : index
    %c70_211 = arith.constant 70 : index
    %502 = vector.load %arg6[%c1_210, %c70_211] : memref<2x358xf32, #tpu.memory_space<vmem>>, vector<1x256xf32>
    %503 = vector.broadcast %501 : f32 to vector<1x256xf32>
    %504 = arith.mulf %503, %502 : vector<1x256xf32>
    %505 = arith.addf %500, %504 : vector<1x256xf32>
    %c41 = arith.constant 41 : index
    %506 = memref.load %arg1[%c41] : memref<98xf32, #tpu.memory_space<smem>>
    %c0_212 = arith.constant 0 : index
    %c86_213 = arith.constant 86 : index
    %507 = vector.load %arg6[%c0_212, %c86_213] : memref<2x358xf32, #tpu.memory_space<vmem>>, vector<1x256xf32>
    %508 = vector.broadcast %506 : f32 to vector<1x256xf32>
    %509 = arith.mulf %508, %507 : vector<1x256xf32>
    %510 = arith.addf %505, %509 : vector<1x256xf32>
    %c90 = arith.constant 90 : index
    %511 = memref.load %arg1[%c90] : memref<98xf32, #tpu.memory_space<smem>>
    %c1_214 = arith.constant 1 : index
    %c86_215 = arith.constant 86 : index
    %512 = vector.load %arg6[%c1_214, %c86_215] : memref<2x358xf32, #tpu.memory_space<vmem>>, vector<1x256xf32>
    %513 = vector.broadcast %511 : f32 to vector<1x256xf32>
    %514 = arith.mulf %513, %512 : vector<1x256xf32>
    %515 = arith.addf %510, %514 : vector<1x256xf32>
    %c48_216 = arith.constant 48 : index
    %516 = memref.load %arg1[%c48_216] : memref<98xf32, #tpu.memory_space<smem>>
    %c0_217 = arith.constant 0 : index
    %c102 = arith.constant 102 : index
    %517 = vector.load %arg6[%c0_217, %c102] : memref<2x358xf32, #tpu.memory_space<vmem>>, vector<1x256xf32>
    %518 = vector.broadcast %516 : f32 to vector<1x256xf32>
    %519 = arith.mulf %518, %517 : vector<1x256xf32>
    %520 = arith.addf %515, %519 : vector<1x256xf32>
    %c97_218 = arith.constant 97 : index
    %521 = memref.load %arg1[%c97_218] : memref<98xf32, #tpu.memory_space<smem>>
    %c1_219 = arith.constant 1 : index
    %c102_220 = arith.constant 102 : index
    %522 = vector.load %arg6[%c1_219, %c102_220] : memref<2x358xf32, #tpu.memory_space<vmem>>, vector<1x256xf32>
    %523 = vector.broadcast %521 : f32 to vector<1x256xf32>
    %524 = arith.mulf %523, %522 : vector<1x256xf32>
    %525 = arith.addf %520, %524 : vector<1x256xf32>
    %c6_221 = arith.constant 6 : index
    %c0_222 = arith.constant 0 : index
    %526 = vector.load %arg3[%c6_221, %c0_222] : memref<7x256xf32, #tpu.memory_space<vmem>>, vector<1x256xf32>
    %527 = arith.mulf %526, %525 : vector<1x256xf32>
    %528 = arith.addf %454, %527 : vector<1x256xf32>
    %c0_223 = arith.constant 0 : index
    %529 = memref.load %arg2[%c0_223] : memref<2xf32, #tpu.memory_space<smem>>
    %530 = vector.broadcast %529 : f32 to vector<1x256xf32>
    %531 = arith.mulf %528, %530 : vector<1x256xf32>
    %c1_224 = arith.constant 1 : index
    %532 = memref.load %arg2[%c1_224] : memref<2xf32, #tpu.memory_space<smem>>
    %533 = vector.broadcast %532 : f32 to vector<1x256xf32>
    %534 = arith.addf %531, %533 : vector<1x256xf32>
    %535 = arith.negf %534 : vector<1x256xf32>
    %536 = math.exp %535 : vector<1x256xf32>
    %cst_225 = arith.constant 1.000000e+00 : f32
    %537 = vector.broadcast %cst_225 : f32 to vector<1x256xf32>
    %538 = arith.addf %537, %536 : vector<1x256xf32>
    %539 = arith.divf %537, %538 : vector<1x256xf32>
    %540 = vector.broadcast %539 : vector<1x256xf32> to vector<4x256xf32>
    %541 = arith.mulf %1, %540 : vector<4x256xf32>
    %c0_226 = arith.constant 0 : index
    %c0_227 = arith.constant 0 : index
    %c0_228 = arith.constant 0 : index
    %542 = vector.load %arg5[%c0_226, %c0_227, %c0_228] : memref<1x4x256xf32, #tpu.memory_space<vmem>>, vector<1x4x256xf32>
    %543 = vector.shape_cast %542 : vector<1x4x256xf32> to vector<4x256xf32>
    %544 = vector.shape_cast %541 : vector<4x256xf32> to vector<1x4x256xf32>
    tpu.vector_store %arg5[%c0_226, %c0_227, %c0_228], %544 {strides = array<i32>} : memref<1x4x256xf32, #tpu.memory_space<vmem>>, vector<1x4x256xf32>,
    return
  }
  func.func @transform_0(%arg0: i32) -> i32 {
    %c0_i32 = arith.constant 0 : i32
    %c0_i32_0 = arith.constant 0 : i32
    return %c0_i32 : i32
  }
  func.func @transform_1(%arg0: i32) -> i32 {
    %c0_i32 = arith.constant 0 : i32
    %c0_i32_0 = arith.constant 0 : i32
    return %c0_i32 : i32
  }
  func.func @transform_2(%arg0: i32) -> (i32, i32) {
    %c0_i32 = arith.constant 0 : i32
    %c0_i32_0 = arith.constant 0 : i32
    %c0_i32_1 = arith.constant 0 : i32
    return %c0_i32, %c0_i32_0 : i32, i32
  }
  func.func @transform_3(%arg0: i32) -> (i32, i32, i32) {
    %c0_i32 = arith.constant 0 : i32
    %c0_i32_0 = arith.constant 0 : i32
    %c0_i32_1 = arith.constant 0 : i32
    return %arg0, %c0_i32, %c0_i32_0 : i32, i32, i32
  }
  func.func @transform_4(%arg0: i32) -> (i32, i32, i32) {
    %c0_i32 = arith.constant 0 : i32
    %c0_i32_0 = arith.constant 0 : i32
    %c0_i32_1 = arith.constant 0 : i32
    return %arg0, %c0_i32, %c0_i32_0 : i32, i32, i32
  }
}

</mosaic_0001>

<llo_original>
// kernel: tpu_custom_call.1
$region0: #{tpu_custom_call.1}
  #allocation0 [shape = 'u32[]', space=smem, size = 0x4, offset = 0x4, fixed_abs, tag = 'smem constant byte address 0x4 - core index']
  #allocation1 [shape = 'u32[144,128]{1,0:T(1,128)}', space=vmem, size = 0x12000, scoped, tag = 'internal scratch']
  #allocation2 [shape = 'f32[2,358]{1,0:T(2,128)}', space=vmem, size = 0xc00, scoped, tag = 'scratch operand']
  %s0 = inlined_call_operand.hbm [shape: f32[98], index: 0, kind: input, shape index: {}]
  %s1 = inlined_call_operand.vmem [shape: f32[2], index: 1, kind: input, shape index: {}]
  %s2 = inlined_call_operand.hbm [shape: f32[7,256], index: 2, kind: input, shape index: {}]
  %s3 = inlined_call_operand.hbm [shape: f32[2,4,256], index: 3, kind: input, shape index: {}]
  %s4 = inlined_call_operand.hbm [shape: f32[2,4,256], index: 4, kind: output, shape index: {}]
  %s5 = sld [smem:[#allocation0]]
  $region65: #{tpu_custom_call.1} parent=0
    _
  %s7 = ssub.s32 1, %s5
  %s8 = scalar_select 0, %s7, %s5
  $region1: #{tpu_custom_call.1} parent=0
    #allocation3 [shape = 'u8[512]{0}', space=smem, size = 0x200, scoped, tag = 'input window, operand 0, single buffered']
    #allocation4 [shape = 's32[2]{0}', space=sflag, size = 0x8, scoped, tag = 'scoped memory for tpu_custom_call.1']
    #allocation5 [shape = 's32[2]{0}', space=sflag, size = 0x8, scoped, tag = 'scoped memory for tpu_custom_call.1']
    #allocation6 [shape = 's32[2]{0}', space=sflag, size = 0x8, scoped, tag = 'scoped memory for tpu_custom_call.1']
    #allocation7 [shape = 's32[2]{0}', space=sflag, size = 0x8, scoped, tag = 'scoped memory for tpu_custom_call.1']
    #allocation8 [shape = 'u8[512]{0}', space=smem, size = 0x200, scoped, tag = 'input window, operand 1, single buffered']
    #allocation9 [shape = 'u8[8192]{0}', space=vmem, size = 0x2000, scoped, tag = 'input window, operand 2, single buffered']
    #allocation10 [shape = 'u8[8192]{0}', space=vmem, size = 0x2000, scoped, tag = 'input window, operand 3']
    #allocation11 [shape = 's32[2]{0}', space=sflag, size = 0x8, scoped, tag = 'scoped memory for tpu_custom_call.1']
    #allocation12 [shape = 'u8[8192]{0}', space=vmem, size = 0x2000, scoped, tag = 'output window, operand 0']
    %9 = vsyncpa [#allocation6], 0
    %10 = vsyncpa [#allocation7], 0
    %11 = vsyncpa [#allocation4], 0
    %12 = vsyncpa [#allocation11], 0
    %s13 = scalar_lea.sflag [#allocation11], 1
    %14 = vsyncpa %s13, 0
    %15 = vsyncpa [#allocation5], 0
    %s16 = scalar_lea.sflag [#allocation5], 1
    %17 = vsyncpa %s16, 0
    loop: start=0, step=1, limit=4
    $region2: #{tpu_custom_call.1} parent=1 // loop_pre_header
      _
    $region3: #{tpu_custom_call.1} parent=1 // loop_header
      %s19 = sphi 0, %s23
      %p20 = scmp.ge.s32.totalorder %s19, 4
      %s27 = sphi 0, %s27
      %s29 = sphi 0, %s27
      %s30 = sphi 0, %s29
      %s44 = sphi 0, %s30
      %s48 = sphi 0, %s48
      %s50 = sphi 0, %s48
      %s51 = sphi 0, %s50
      %s65 = sphi 0, %s51
      %s69 = sphi 0, %s69
      %s71 = sphi 0, %s69
      %s72 = sphi 0, %s71
      %s86 = sphi 0, %s72
      %s92 = sphi 0, %s94
      %s95 = sphi 0, %s92
      %s96 = sphi 0, %s95
      %s112 = sphi 0, %s96
      %s118 = sphi 0, %s120
      %s121 = sphi 0, %s118
      %s122 = sphi 0, %s121
      %s138 = sphi 0, %s122
    $region4: #{tpu_custom_call.1} parent=1 // loop_header_branch
      %22 = sbr.rel (%p20) target = $region8
    $region5: #{tpu_custom_call.1} parent=1 // loop_body
      %s24 = ssub.s32 %s19, 1
      %s25 = ssub.s32 %s19, 2
      %s26 = sadd.s32 %s19, 1
      %s28 = sadd.s32 %s27, 1
      %p31 = scmp.eq.s32.totalorder %s19, 1
      %p32 = scmp.ne.s32.totalorder %s27, %s29
      %p33 = scmp.eq.s32.totalorder %s19, 0
      %p34 = por %p32, %p33
      %p35 = scmp.ne.s32.totalorder %s27, %s29
      %p36 = scmp.eq.s32.totalorder %s24, 1
      %p37 = por %p35, %p36
      %p38 = scmp.ne.s32.totalorder %s29, %s30
      %p39 = scmp.eq.s32.totalorder %s24, 0
      %p40 = por %p38, %p39
      %p41 = scmp.ne.s32.totalorder %s29, %s30
      %p42 = scmp.eq.s32.totalorder %s25, 1
      %p43 = por %p41, %p42
      %p45 = scmp.ne.s32.totalorder %s30, %s44
      %p46 = scmp.eq.s32.totalorder %s25, 0
      %p47 = por %p45, %p46
      %s49 = sadd.s32 %s48, 1
      %p52 = scmp.eq.s32.totalorder %s19, 1
      %p53 = scmp.ne.s32.totalorder %s48, %s50
      %p54 = scmp.eq.s32.totalorder %s19, 0
      %p55 = por %p53, %p54
      %p56 = scmp.ne.s32.totalorder %s48, %s50
      %p57 = scmp.eq.s32.totalorder %s24, 1
      %p58 = por %p56, %p57
      %p59 = scmp.ne.s32.totalorder %s50, %s51
      %p60 = scmp.eq.s32.totalorder %s24, 0
      %p61 = por %p59, %p60
      %p62 = scmp.ne.s32.totalorder %s50, %s51
      %p63 = scmp.eq.s32.totalorder %s25, 1
      %p64 = por %p62, %p63
      %p66 = scmp.ne.s32.totalorder %s51, %s65
      %p67 = scmp.eq.s32.totalorder %s25, 0
      %p68 = por %p66, %p67
      %s70 = sadd.s32 %s69, 1
      %p73 = scmp.eq.s32.totalorder %s19, 1
      %p74 = scmp.ne.s32.totalorder %s69, %s71
      %p75 = scmp.eq.s32.totalorder %s19, 0
      %p76 = por %p74, %p75
      %p77 = scmp.ne.s32.totalorder %s69, %s71
      %p78 = scmp.eq.s32.totalorder %s24, 1
      %p79 = por %p77, %p78
      %p80 = scmp.ne.s32.totalorder %s71, %s72
      %p81 = scmp.eq.s32.totalorder %s24, 0
      %p82 = por %p80, %p81
      %p83 = scmp.ne.s32.totalorder %s71, %s72
      %p84 = scmp.eq.s32.totalorder %s25, 1
      %p85 = por %p83, %p84
      %p87 = scmp.ne.s32.totalorder %s72, %s86
      %p88 = scmp.eq.s32.totalorder %s25, 0
      %p89 = por %p87, %p88
      %s90 = ssub.s32 %s19, %s26
      %p91 = scmp.eq.s32.totalorder %s90, 0
      %s93 = sadd.s32 %s92, 1
      %s94 = scalar_select %p91, %s92, %s93
      %p97 = pneg %p91
      %p98 = scmp.eq.s32.totalorder %s19, 1
      %p99 = por %p97, %p98
      %p100 = scmp.ne.s32.totalorder %s92, %s95
      %p101 = scmp.eq.s32.totalorder %s19, 0
      %p102 = por %p100, %p101
      %p103 = scmp.ne.s32.totalorder %s92, %s95
      %p104 = scmp.eq.s32.totalorder %s24, 1
      %p105 = por %p103, %p104
      %p106 = scmp.ne.s32.totalorder %s95, %s96
      %p107 = scmp.eq.s32.totalorder %s24, 0
      %p108 = por %p106, %p107
      %p109 = scmp.ne.s32.totalorder %s95, %s96
      %p110 = scmp.eq.s32.totalorder %s25, 1
      %p111 = por %p109, %p110
      %p113 = scmp.ne.s32.totalorder %s96, %s112
      %p114 = scmp.eq.s32.totalorder %s25, 0
      %p115 = por %p113, %p114
      %s116 = ssub.s32 %s19, %s26
      %p117 = scmp.eq.s32.totalorder %s116, 0
      %s119 = sadd.s32 %s118, 1
      %s120 = scalar_select %p117, %s118, %s119
      %p123 = pneg %p117
      %p124 = scmp.eq.s32.totalorder %s19, 1
      %p125 = por %p123, %p124
      %p126 = scmp.ne.s32.totalorder %s118, %s121
      %p127 = scmp.eq.s32.totalorder %s19, 0
      %p128 = por %p126, %p127
      %p129 = scmp.ne.s32.totalorder %s118, %s121
      %p130 = scmp.eq.s32.totalorder %s24, 1
      %p131 = por %p129, %p130
      %p132 = scmp.ne.s32.totalorder %s121, %s122
      %p133 = scmp.eq.s32.totalorder %s24, 0
      %p134 = por %p132, %p133
      %p135 = scmp.ne.s32.totalorder %s121, %s122
      %p136 = scmp.eq.s32.totalorder %s25, 1
      %p137 = por %p135, %p136
      %p139 = scmp.ne.s32.totalorder %s122, %s138
      %p140 = scmp.eq.s32.totalorder %s25, 0
      %p141 = por %p139, %p140
      %p142 = scmp.le.s32.totalorder 1, %s19
      %p143 = scmp.lt.s32.totalorder %s19, 3
      %p144 = pnand %p142, %p143
      %p145 = pneg %p144
      // Predicated region
      $region9: #{tpu_custom_call.1} parent=5 // pred_check
        _
      $region10: #{tpu_custom_call.1} parent=5 // pred_check_branch
        %147 = sbr.rel (%p144) target = $region12
      $region11: #{tpu_custom_call.1} parent=5 // pred_region
        %s148 = ssub.s32 %s19, 1
        // Predicated region
        $region13: #{tpu_custom_call.1} parent=11 // pred_check
          %p149 = pneg %p40
        $region14: #{tpu_custom_call.1} parent=11 // pred_check_branch
          %151 = sbr.rel (%p149) target = $region16
        $region15: #{tpu_custom_call.1} parent=11 // pred_region
          %s153 = ssub.s32 16, 16
          %154 = vsyncadd [#allocation6], %s153
          %157 = dma.hbm_to_smem %s0, 16, [#allocation3], [#allocation6]
        $region16: #{tpu_custom_call.1} parent=11 // pred_fallthru
          _
        // Predicated region
        $region17: #{tpu_custom_call.1} parent=11 // pred_check
          %p158 = pneg %p61
        $region18: #{tpu_custom_call.1} parent=11 // pred_check_branch
          %160 = sbr.rel (%p158) target = $region20
        $region19: #{tpu_custom_call.1} parent=11 // pred_region
          %s162 = ssub.s32 16, 16
          %163 = vsyncadd [#allocation7], %s162
          %s165 = sshll.u32 %s1, 4
          %s166 = int_to_ptr.vmem [resolvable:$true] %s165
          %168 = dma.vmem_to_smem %s166, 16, [#allocation8], [#allocation7]
        $region20: #{tpu_custom_call.1} parent=11 // pred_fallthru
          _
        // Predicated region
        $region21: #{tpu_custom_call.1} parent=11 // pred_check
          %p169 = pneg %p82
        $region22: #{tpu_custom_call.1} parent=11 // pred_check_branch
          %171 = sbr.rel (%p169) target = $region24
        $region23: #{tpu_custom_call.1} parent=11 // pred_region
          %s173 = ssub.s32 256, 256
          %174 = vsyncadd [#allocation4], %s173
          %s176 = sshll.u32 [#allocation9], 4
          %s177 = int_to_ptr.vmem [resolvable:$true] %s176
          %179 = dma.hbm_to_vmem [thread:$0]  %s2, 256, %s177, [#allocation4]
        $region24: #{tpu_custom_call.1} parent=11 // pred_fallthru
          _
      $region12: #{tpu_custom_call.1} parent=5 // pred_fallthru
        _
      %p180 = scmp.lt.s32.totalorder %s19, 2
      // Predicated region
      $region25: #{tpu_custom_call.1} parent=5 // pred_check
        %p181 = pneg %p180
      $region26: #{tpu_custom_call.1} parent=5 // pred_check_branch
        %183 = sbr.rel (%p181) target = $region28
      $region27: #{tpu_custom_call.1} parent=5 // pred_region
        // Predicated region
        $region29: #{tpu_custom_call.1} parent=27 // pred_check
          %p184 = pneg %p102
        $region30: #{tpu_custom_call.1} parent=27 // pred_check_branch
          %186 = sbr.rel (%p184) target = $region32
        $region31: #{tpu_custom_call.1} parent=27 // pred_region
          %s187 = sand.u32 %s92, 1
          %s188 = scalar_lea.sflag [#allocation11], %s187
          %s189 = sand.u32 %s92, 1
          %s190 = smul.addr %s189, 8
          %s191 = scalar_lea.vmem [#allocation10], %s190
          %s193 = ssub.s32 128, 128
          %194 = vsyncadd %s188, %s193
          %s195 = smul.addr %s19, 2
          %s196 = smul.addr %s195, 64
          %s197 = scalar_lea.hbm %s3, %s196
          %s199 = sshll.u32 %s191, 4
          %s200 = int_to_ptr.vmem [resolvable:$true] %s199
          %202 = dma.hbm_to_vmem [thread:$0]  %s197, 128, %s200, %s188
        $region32: #{tpu_custom_call.1} parent=27 // pred_fallthru
          _
      $region28: #{tpu_custom_call.1} parent=5 // pred_fallthru
        _
      %p203 = scmp.le.s32.totalorder 1, %s19
      %p204 = scmp.lt.s32.totalorder %s19, 3
      %p205 = pnand %p203, %p204
      %p206 = pneg %p205
      // Predicated region
      $region33: #{tpu_custom_call.1} parent=5 // pred_check
        _
      $region34: #{tpu_custom_call.1} parent=5 // pred_check_branch
        %208 = sbr.rel (%p205) target = $region36
      $region35: #{tpu_custom_call.1} parent=5 // pred_region
        %s209 = ssub.s32 %s19, 1
        // Predicated region
        $region37: #{tpu_custom_call.1} parent=35 // pred_check
          %p210 = pneg %p40
        $region38: #{tpu_custom_call.1} parent=35 // pred_check_branch
          %212 = sbr.rel (%p210) target = $region40
        $region39: #{tpu_custom_call.1} parent=35 // pred_region
          %213 = dma.done [#allocation6], 16
        $region40: #{tpu_custom_call.1} parent=35 // pred_fallthru
          _
        // Predicated region
        $region41: #{tpu_custom_call.1} parent=35 // pred_check
          %p214 = pneg %p61
        $region42: #{tpu_custom_call.1} parent=35 // pred_check_branch
          %216 = sbr.rel (%p214) target = $region44
        $region43: #{tpu_custom_call.1} parent=35 // pred_region
          %217 = dma.done [#allocation7], 16
        $region44: #{tpu_custom_call.1} parent=35 // pred_fallthru
          _
        // Predicated region
        $region45: #{tpu_custom_call.1} parent=35 // pred_check
          %p218 = pneg %p82
        $region46: #{tpu_custom_call.1} parent=35 // pred_check_branch
          %220 = sbr.rel (%p218) target = $region48
        $region47: #{tpu_custom_call.1} parent=35 // pred_region
          %221 = dma.done [#allocation4], 256
        $region48: #{tpu_custom_call.1} parent=35 // pred_fallthru
          _
        %s222 = sand.u32 %s95, 1
        %s223 = scalar_lea.sflag [#allocation11], %s222
        %s224 = sand.u32 %s95, 1
        %s225 = smul.addr %s224, 8
        %s226 = scalar_lea.vmem [#allocation10], %s225
        // Predicated region
        $region49: #{tpu_custom_call.1} parent=35 // pred_check
          %p227 = pneg %p108
        $region50: #{tpu_custom_call.1} parent=35 // pred_check_branch
          %229 = sbr.rel (%p227) target = $region52
        $region51: #{tpu_custom_call.1} parent=35 // pred_region
          %230 = dma.done %s223, 128
        $region52: #{tpu_custom_call.1} parent=35 // pred_fallthru
          _
        %231 = sfence
        %p232 = pneg %p40
        %p233 = pneg %p37
        %p234 = pneg %p61
        %p235 = pneg %p58
        %p236 = pneg %p82
        %p237 = pneg %p79
        %s238 = sand.u32 %s95, 1
        %s239 = scalar_lea.sflag [#allocation11], %s238
        %s240 = sand.u32 %s95, 1
        %s241 = smul.addr %s240, 8
        %s242 = scalar_lea.vmem [#allocation10], %s241
        %p243 = pneg %p108
        %p244 = pneg %p105
        %p245 = pneg %p134
        %p246 = pneg %p131
        %s247 = sand.u32 %s121, 1
        %s248 = scalar_lea.sflag [#allocation5], %s247
        %s249 = sand.u32 %s121, 1
        %s250 = smul.addr %s249, 8
        %s251 = scalar_lea.vmem [#allocation12], %s250
        %v252 = vld [vmem:[%s226] sm:$0xff]
        %v254 = vcombine.high %v252, %v252
        %vm256 = vcmask 1043456
        %v257 = vsel %vm256, %v252, -inf
        %v258 = vrot.slane %v257, 4
        %v259 = vmax.f32 %v257, %v258
        %v260 = vrot.slane %v259, 2
        %v261 = vmax.f32 %v259, %v260
        %v262 = vrot.slane %v261, 1
        %v263 = vmax.f32 %v261, %v262
        %v264 = vsel %vm256, %v254, -inf
        %v265 = vrot.slane %v264, 4
        %v266 = vmax.f32 %v264, %v265
        %v267 = vrot.slane %v266, 2
        %v268 = vmax.f32 %v266, %v267
        %v269 = vrot.slane %v268, 1
        %v270 = vmax.f32 %v268, %v269
        %v271 = vsel %vm256, %v252, 0.0
        %v272 = vrot.slane %v271, 4
        %v273 = vadd.f32 %v271, %v272
        %v274 = vrot.slane %v273, 2
        %v275 = vadd.f32 %v273, %v274
        %v276 = vrot.slane %v275, 1
        %v277 = vadd.f32 %v275, %v276
        %v278 = vsel %vm256, %v254, 0.0
        %v279 = vrot.slane %v278, 4
        %v280 = vadd.f32 %v278, %v279
        %v281 = vrot.slane %v280, 2
        %v282 = vadd.f32 %v280, %v281
        %v283 = vrot.slane %v282, 1
        %v284 = vadd.f32 %v282, %v283
        %v285 = vmul.f32 %v277, 0.25
        %v286 = vmul.f32 %v284, 0.25
        %vm287 = vcmask 1041408
        %vm288 = vcmask 1043458
        %vm289 = vmor %vm288, %vm287
        %vm290 = vcmask 832516
        %vm291 = vmor %vm290, %vm289
        %292 = vst.msk [vmem:[#allocation2] sm:$0x3f] %vm291, 0.0
        %v295 = vcombine.low %v263, %v270
        %v297 = vunpack.c.l.s4 1966171168
        %v298 = vunpack.c.0.s8 %v297
        %v299 = vlaneseq
        %v300 = vshrl.u32 %v299, 7
        %v301 = vsub.s32 %v298, %v300
        %v302 = vrot.slane %v295, %v301
        %v304 = vunpack.c.l.s4 1966171168
        %v305 = vunpack.c.0.s8 %v304
        %v306 = vlaneseq
        %v307 = vshrl.u32 %v306, 7
        %v308 = vsub.s32 %v305, %v307
        %v309 = vrot.slane %v302, %v308
        %310 = vrot.lane.b32.xlu0 %v309, 51
        %v311 = vpop.permute.xlu0 %310
        %v312 = vrot.slane %v311, 7
        %vm313 = vcmask 416768
        %v314 = vsel %vm313, %v312, %v311
        %v316 = vlaneseq
        %vm317 = vcmp.ge.s32.totalorder %v316, 51
        %vm318 = vcmp.lt.s32.totalorder %v316, 307
        %vm319 = vmand %vm317, %vm318
        %320 = vst.msk [vmem:[#allocation2] ss:$2 sm:$0x7] %vm319, %v314
        %v323 = vcombine.low %v285, %v286
        %v325 = vunpack.c.l.s4 1966171168
        %v326 = vunpack.c.0.s8 %v325
        %v327 = vlaneseq
        %v328 = vshrl.u32 %v327, 7
        %v329 = vsub.s32 %v326, %v328
        %v330 = vrot.slane %v323, %v329
        %v332 = vunpack.c.l.s4 1966171168
        %v333 = vunpack.c.0.s8 %v332
        %v334 = vlaneseq
        %v335 = vshrl.u32 %v334, 7
        %v336 = vsub.s32 %v333, %v335
        %v337 = vrot.slane %v330, %v336
        %338 = vrot.lane.b32.xlu0 %v337, 51
        %v339 = vpop.permute.xlu0 %338
        %v340 = vrot.slane %v339, 7
        %v341 = vsel %vm313, %v340, %v339
        %s343 = scalar_lea.vmem [#allocation2], 1
        %344 = vst.msk [vmem:[%s343] ss:$2 sm:$0x7] %vm319, %v341
        %s345 = sld [smem:[#allocation3]]
        %v346 = vld [vmem:[#allocation2] ss:$2 sm:$0x3]
        %v347 = vstv %s345
        %v348 = vmul.f32 %v347, %v346
        %v349 = vadd.f32 %v348, 0.0
        %s350 = sld [smem:[#allocation3 + $0x31]]
        %v351 = vld [vmem:[%s343] ss:$2 sm:$0x3]
        %v352 = vstv %s350
        %v353 = vmul.f32 %v352, %v351
        %v354 = vadd.f32 %v349, %v353
        %s355 = sld [smem:[#allocation3 + $0x7]]
        %v356 = vld [vmem:[#allocation2] ss:$2 sm:$0x7]
        %v357 = vstv %s355
        %v358 = vmul.f32 %v357, %v356
        %360 = vrot.lane.b32.xlu0 %v358, 112
        %v361 = vpop.permute.xlu0 %360
        %v362 = vrot.slane %v361, 1
        %vm363 = vcmask 916480
        %v364 = vsel %vm363, %v361, %v362
        %v366 = vadd.f32 %v354, %v364
        %s367 = sld [smem:[#allocation3 + $0x38]]
        %v368 = vld [vmem:[%s343] ss:$2 sm:$0x7]
        %v369 = vstv %s367
        %v370 = vmul.f32 %v369, %v368
        %372 = vrot.lane.b32.xlu0 %v370, 112
        %v373 = vpop.permute.xlu0 %372
        %v374 = vrot.slane %v373, 1
        %v375 = vsel %vm363, %v373, %v374
        %v377 = vadd.f32 %v366, %v375
        %s378 = sld [smem:[#allocation3 + $0xe]]
        %v379 = vstv %s378
        %v380 = vmul.f32 %v379, %v356
        %382 = vrot.lane.b32.xlu0 %v380, 96
        %v383 = vpop.permute.xlu0 %382
        %v384 = vrot.slane %v383, 1
        %vm385 = vcmask 785408
        %v386 = vsel %vm385, %v383, %v384
        %v388 = vadd.f32 %v377, %v386
        %s389 = sld [smem:[#allocation3 + $0x3f]]
        %v390 = vstv %s389
        %v391 = vmul.f32 %v390, %v368
        %393 = vrot.lane.b32.xlu0 %v391, 96
        %v394 = vpop.permute.xlu0 %393
        %v395 = vrot.slane %v394, 1
        %v396 = vsel %vm385, %v394, %v395
        %v398 = vadd.f32 %v388, %v396
        %s399 = sld [smem:[#allocation3 + $0x15]]
        %v400 = vstv %s399
        %v401 = vmul.f32 %v400, %v356
        %403 = vrot.lane.b32.xlu0 %v401, 80
        %v404 = vpop.permute.xlu0 %403
        %v405 = vrot.slane %v404, 1
        %vm406 = vcmask 654336
        %v407 = vsel %vm406, %v404, %v405
        %v409 = vadd.f32 %v398, %v407
        %s410 = sld [smem:[#allocation3 + $0x46]]
        %v411 = vstv %s410
        %v412 = vmul.f32 %v411, %v368
        %414 = vrot.lane.b32.xlu0 %v412, 80
        %v415 = vpop.permute.xlu0 %414
        %v416 = vrot.slane %v415, 1
        %v417 = vsel %vm406, %v415, %v416
        %v419 = vadd.f32 %v409, %v417
        %s420 = sld [smem:[#allocation3 + $0x1c]]
        %v421 = vstv %s420
        %v422 = vmul.f32 %v421, %v356
        %424 = vrot.lane.b32.xlu0 %v422, 64
        %v425 = vpop.permute.xlu0 %424
        %v426 = vrot.slane %v425, 1
        %vm427 = vcmask 523264
        %v428 = vsel %vm427, %v425, %v426
        %v430 = vadd.f32 %v419, %v428
        %s431 = sld [smem:[#allocation3 + $0x4d]]
        %v432 = vstv %s431
        %v433 = vmul.f32 %v432, %v368
        %435 = vrot.lane.b32.xlu0 %v433, 64
        %v436 = vpop.permute.xlu0 %435
        %v437 = vrot.slane %v436, 1
        %v438 = vsel %vm427, %v436, %v437
        %v440 = vadd.f32 %v430, %v438
        %s441 = sld [smem:[#allocation3 + $0x23]]
        %v442 = vstv %s441
        %v443 = vmul.f32 %v442, %v356
        %445 = vrot.lane.b32.xlu0 %v443, 48
        %v446 = vpop.permute.xlu0 %445
        %v447 = vrot.slane %v446, 1
        %vm448 = vcmask 392192
        %v449 = vsel %vm448, %v446, %v447
        %v451 = vadd.f32 %v440, %v449
        %s452 = sld [smem:[#allocation3 + $0x54]]
        %v453 = vstv %s452
        %v454 = vmul.f32 %v453, %v368
        %456 = vrot.lane.b32.xlu0 %v454, 48
        %v457 = vpop.permute.xlu0 %456
        %v458 = vrot.slane %v457, 1
        %v459 = vsel %vm448, %v457, %v458
        %v461 = vadd.f32 %v451, %v459
        %s462 = sld [smem:[#allocation3 + $0x2a]]
        %v463 = vstv %s462
        %v464 = vmul.f32 %v463, %v356
        %466 = vrot.lane.b32.xlu0 %v464, 32
        %v467 = vpop.permute.xlu0 %466
        %v468 = vrot.slane %v467, 1
        %vm469 = vcmask 261120
        %v470 = vsel %vm469, %v467, %v468
        %v472 = vadd.f32 %v461, %v470
        %s473 = sld [smem:[#allocation3 + $0x5b]]
        %v474 = vstv %s473
        %v475 = vmul.f32 %v474, %v368
        %477 = vrot.lane.b32.xlu0 %v475, 32
        %v478 = vpop.permute.xlu0 %477
        %v479 = vrot.slane %v478, 1
        %v480 = vsel %vm469, %v478, %v479
        %v482 = vadd.f32 %v472, %v480
        %v483 = vld [vmem:[#allocation9] ss:$8 sm:$0x3]
        %v484 = vmul.f32 %v483, %v482
        %v485 = vadd.f32 %v484, 0.0
        %s486 = sld [smem:[#allocation3 + $0x1]]
        %v487 = vstv %s486
        %v488 = vmul.f32 %v487, %v356
        %v489 = vadd.f32 %v488, 0.0
        %s490 = sld [smem:[#allocation3 + $0x32]]
        %v491 = vstv %s490
        %v492 = vmul.f32 %v491, %v368
        %v493 = vadd.f32 %v489, %v492
        %s494 = sld [smem:[#allocation3 + $0x8]]
        %v495 = vstv %s494
        %v496 = vmul.f32 %v495, %v356
        %498 = vrot.lane.b32.xlu0 %v496, 112
        %v499 = vpop.permute.xlu0 %498
        %v500 = vrot.slane %v499, 1
        %v501 = vsel %vm363, %v499, %v500
        %v503 = vadd.f32 %v493, %v501
        %s504 = sld [smem:[#allocation3 + $0x39]]
        %v505 = vstv %s504
        %v506 = vmul.f32 %v505, %v368
        %508 = vrot.lane.b32.xlu0 %v506, 112
        %v509 = vpop.permute.xlu0 %508
        %v510 = vrot.slane %v509, 1
        %v511 = vsel %vm363, %v509, %v510
        %v513 = vadd.f32 %v503, %v511
        %s514 = sld [smem:[#allocation3 + $0xf]]
        %v515 = vstv %s514
        %v516 = vmul.f32 %v515, %v356
        %518 = vrot.lane.b32.xlu0 %v516, 96
        %v519 = vpop.permute.xlu0 %518
        %v520 = vrot.slane %v519, 1
        %v521 = vsel %vm385, %v519, %v520
        %v523 = vadd.f32 %v513, %v521
        %s524 = sld [smem:[#allocation3 + $0x40]]
        %v525 = vstv %s524
        %v526 = vmul.f32 %v525, %v368
        %528 = vrot.lane.b32.xlu0 %v526, 96
        %v529 = vpop.permute.xlu0 %528
        %v530 = vrot.slane %v529, 1
        %v531 = vsel %vm385, %v529, %v530
        %v533 = vadd.f32 %v523, %v531
        %s534 = sld [smem:[#allocation3 + $0x16]]
        %v535 = vstv %s534
        %v536 = vmul.f32 %v535, %v356
        %538 = vrot.lane.b32.xlu0 %v536, 80
        %v539 = vpop.permute.xlu0 %538
        %v540 = vrot.slane %v539, 1
        %v541 = vsel %vm406, %v539, %v540
        %v543 = vadd.f32 %v533, %v541
        %s544 = sld [smem:[#allocation3 + $0x47]]
        %v545 = vstv %s544
        %v546 = vmul.f32 %v545, %v368
        %548 = vrot.lane.b32.xlu0 %v546, 80
        %v549 = vpop.permute.xlu0 %548
        %v550 = vrot.slane %v549, 1
        %v551 = vsel %vm406, %v549, %v550
        %v553 = vadd.f32 %v543, %v551
        %s554 = sld [smem:[#allocation3 + $0x1d]]
        %v555 = vstv %s554
        %v556 = vmul.f32 %v555, %v356
        %558 = vrot.lane.b32.xlu0 %v556, 64
        %v559 = vpop.permute.xlu0 %558
        %v560 = vrot.slane %v559, 1
        %v561 = vsel %vm427, %v559, %v560
        %v563 = vadd.f32 %v553, %v561
        %s564 = sld [smem:[#allocation3 + $0x4e]]
        %v565 = vstv %s564
        %v566 = vmul.f32 %v565, %v368
        %568 = vrot.lane.b32.xlu0 %v566, 64
        %v569 = vpop.permute.xlu0 %568
        %v570 = vrot.slane %v569, 1
        %v571 = vsel %vm427, %v569, %v570
        %v573 = vadd.f32 %v563, %v571
        %s574 = sld [smem:[#allocation3 + $0x24]]
        %v575 = vstv %s574
        %v576 = vmul.f32 %v575, %v356
        %578 = vrot.lane.b32.xlu0 %v576, 48
        %v579 = vpop.permute.xlu0 %578
        %v580 = vrot.slane %v579, 1
        %v581 = vsel %vm448, %v579, %v580
        %v583 = vadd.f32 %v573, %v581
        %s584 = sld [smem:[#allocation3 + $0x55]]
        %v585 = vstv %s584
        %v586 = vmul.f32 %v585, %v368
        %588 = vrot.lane.b32.xlu0 %v586, 48
        %v589 = vpop.permute.xlu0 %588
        %v590 = vrot.slane %v589, 1
        %v591 = vsel %vm448, %v589, %v590
        %v593 = vadd.f32 %v583, %v591
        %s594 = sld [smem:[#allocation3 + $0x2b]]
        %v595 = vstv %s594
        %v596 = vmul.f32 %v595, %v356
        %598 = vrot.lane.b32.xlu0 %v596, 32
        %v599 = vpop.permute.xlu0 %598
        %v600 = vrot.slane %v599, 1
        %v601 = vsel %vm469, %v599, %v600
        %v603 = vadd.f32 %v593, %v601
        %s604 = sld [smem:[#allocation3 + $0x5c]]
        %v605 = vstv %s604
        %v606 = vmul.f32 %v605, %v368
        %608 = vrot.lane.b32.xlu0 %v606, 32
        %v609 = vpop.permute.xlu0 %608
        %v610 = vrot.slane %v609, 1
        %v611 = vsel %vm469, %v609, %v610
        %v613 = vadd.f32 %v603, %v611
        %s614 = scalar_lea.vmem [#allocation9], 1
        %v615 = vld [vmem:[%s614] ss:$8 sm:$0x3]
        %617 = vrot.lane.b32.xlu0 %v613, 127
        %v618 = vpop.permute.xlu0 %617
        %v619 = vrot.slane %v618, 1
        %vm620 = vcmask 1039360
        %v621 = vsel %vm620, %v618, %v619
        %v623 = vmul.f32 %v615, %v621
        %v624 = vadd.f32 %v485, %v623
        %s625 = sld [smem:[#allocation3 + $0x2]]
        %v626 = vstv %s625
        %v627 = vmul.f32 %v626, %v356
        %v628 = vadd.f32 %v627, 0.0
        %s629 = sld [smem:[#allocation3 + $0x33]]
        %v630 = vstv %s629
        %v631 = vmul.f32 %v630, %v368
        %v632 = vadd.f32 %v628, %v631
        %s633 = sld [smem:[#allocation3 + $0x9]]
        %v634 = vstv %s633
        %v635 = vmul.f32 %v634, %v356
        %637 = vrot.lane.b32.xlu0 %v635, 112
        %v638 = vpop.permute.xlu0 %637
        %v639 = vrot.slane %v638, 1
        %v640 = vsel %vm363, %v638, %v639
        %v642 = vadd.f32 %v632, %v640
        %s643 = sld [smem:[#allocation3 + $0x3a]]
        %v644 = vstv %s643
        %v645 = vmul.f32 %v644, %v368
        %647 = vrot.lane.b32.xlu0 %v645, 112
        %v648 = vpop.permute.xlu0 %647
        %v649 = vrot.slane %v648, 1
        %v650 = vsel %vm363, %v648, %v649
        %v652 = vadd.f32 %v642, %v650
        %s653 = sld [smem:[#allocation3 + $0x10]]
        %v654 = vstv %s653
        %v655 = vmul.f32 %v654, %v356
        %657 = vrot.lane.b32.xlu0 %v655, 96
        %v658 = vpop.permute.xlu0 %657
        %v659 = vrot.slane %v658, 1
        %v660 = vsel %vm385, %v658, %v659
        %v662 = vadd.f32 %v652, %v660
        %s663 = sld [smem:[#allocation3 + $0x41]]
        %v664 = vstv %s663
        %v665 = vmul.f32 %v664, %v368
        %667 = vrot.lane.b32.xlu0 %v665, 96
        %v668 = vpop.permute.xlu0 %667
        %v669 = vrot.slane %v668, 1
        %v670 = vsel %vm385, %v668, %v669
        %v672 = vadd.f32 %v662, %v670
        %s673 = sld [smem:[#allocation3 + $0x17]]
        %v674 = vstv %s673
        %v675 = vmul.f32 %v674, %v356
        %677 = vrot.lane.b32.xlu0 %v675, 80
        %v678 = vpop.permute.xlu0 %677
        %v679 = vrot.slane %v678, 1
        %v680 = vsel %vm406, %v678, %v679
        %v682 = vadd.f32 %v672, %v680
        %s683 = sld [smem:[#allocation3 + $0x48]]
        %v684 = vstv %s683
        %v685 = vmul.f32 %v684, %v368
        %687 = vrot.lane.b32.xlu0 %v685, 80
        %v688 = vpop.permute.xlu0 %687
        %v689 = vrot.slane %v688, 1
        %v690 = vsel %vm406, %v688, %v689
        %v692 = vadd.f32 %v682, %v690
        %s693 = sld [smem:[#allocation3 + $0x1e]]
        %v694 = vstv %s693
        %v695 = vmul.f32 %v694, %v356
        %697 = vrot.lane.b32.xlu0 %v695, 64
        %v698 = vpop.permute.xlu0 %697
        %v699 = vrot.slane %v698, 1
        %v700 = vsel %vm427, %v698, %v699
        %v702 = vadd.f32 %v692, %v700
        %s703 = sld [smem:[#allocation3 + $0x4f]]
        %v704 = vstv %s703
        %v705 = vmul.f32 %v704, %v368
        %707 = vrot.lane.b32.xlu0 %v705, 64
        %v708 = vpop.permute.xlu0 %707
        %v709 = vrot.slane %v708, 1
        %v710 = vsel %vm427, %v708, %v709
        %v712 = vadd.f32 %v702, %v710
        %s713 = sld [smem:[#allocation3 + $0x25]]
        %v714 = vstv %s713
        %v715 = vmul.f32 %v714, %v356
        %717 = vrot.lane.b32.xlu0 %v715, 48
        %v718 = vpop.permute.xlu0 %717
        %v719 = vrot.slane %v718, 1
        %v720 = vsel %vm448, %v718, %v719
        %v722 = vadd.f32 %v712, %v720
        %s723 = sld [smem:[#allocation3 + $0x56]]
        %v724 = vstv %s723
        %v725 = vmul.f32 %v724, %v368
        %727 = vrot.lane.b32.xlu0 %v725, 48
        %v728 = vpop.permute.xlu0 %727
        %v729 = vrot.slane %v728, 1
        %v730 = vsel %vm448, %v728, %v729
        %v732 = vadd.f32 %v722, %v730
        %s733 = sld [smem:[#allocation3 + $0x2c]]
        %v734 = vstv %s733
        %v735 = vmul.f32 %v734, %v356
        %737 = vrot.lane.b32.xlu0 %v735, 32
        %v738 = vpop.permute.xlu0 %737
        %v739 = vrot.slane %v738, 1
        %v740 = vsel %vm469, %v738, %v739
        %v742 = vadd.f32 %v732, %v740
        %s743 = sld [smem:[#allocation3 + $0x5d]]
        %v744 = vstv %s743
        %v745 = vmul.f32 %v744, %v368
        %747 = vrot.lane.b32.xlu0 %v745, 32
        %v748 = vpop.permute.xlu0 %747
        %v749 = vrot.slane %v748, 1
        %v750 = vsel %vm469, %v748, %v749
        %v752 = vadd.f32 %v742, %v750
        %s753 = scalar_lea.vmem [#allocation9], 2
        %v754 = vld [vmem:[%s753] ss:$8 sm:$0x3]
        %756 = vrot.lane.b32.xlu0 %v752, 126
        %v757 = vpop.permute.xlu0 %756
        %v758 = vrot.slane %v757, 1
        %vm759 = vcmask 1031168
        %v760 = vsel %vm759, %v757, %v758
        %v762 = vmul.f32 %v754, %v760
        %v763 = vadd.f32 %v624, %v762
        %s764 = sld [smem:[#allocation3 + $0x3]]
        %v765 = vstv %s764
        %v766 = vmul.f32 %v765, %v356
        %v767 = vadd.f32 %v766, 0.0
        %s768 = sld [smem:[#allocation3 + $0x34]]
        %v769 = vstv %s768
        %v770 = vmul.f32 %v769, %v368
        %v771 = vadd.f32 %v767, %v770
        %s772 = sld [smem:[#allocation3 + $0xa]]
        %v773 = vstv %s772
        %v774 = vmul.f32 %v773, %v356
        %776 = vrot.lane.b32.xlu0 %v774, 112
        %v777 = vpop.permute.xlu0 %776
        %v778 = vrot.slane %v777, 1
        %v779 = vsel %vm363, %v777, %v778
        %v781 = vadd.f32 %v771, %v779
        %s782 = sld [smem:[#allocation3 + $0x3b]]
        %v783 = vstv %s782
        %v784 = vmul.f32 %v783, %v368
        %786 = vrot.lane.b32.xlu0 %v784, 112
        %v787 = vpop.permute.xlu0 %786
        %v788 = vrot.slane %v787, 1
        %v789 = vsel %vm363, %v787, %v788
        %v791 = vadd.f32 %v781, %v789
        %s792 = sld [smem:[#allocation3 + $0x11]]
        %v793 = vstv %s792
        %v794 = vmul.f32 %v793, %v356
        %796 = vrot.lane.b32.xlu0 %v794, 96
        %v797 = vpop.permute.xlu0 %796
        %v798 = vrot.slane %v797, 1
        %v799 = vsel %vm385, %v797, %v798
        %v801 = vadd.f32 %v791, %v799
        %s802 = sld [smem:[#allocation3 + $0x42]]
        %v803 = vstv %s802
        %v804 = vmul.f32 %v803, %v368
        %806 = vrot.lane.b32.xlu0 %v804, 96
        %v807 = vpop.permute.xlu0 %806
        %v808 = vrot.slane %v807, 1
        %v809 = vsel %vm385, %v807, %v808
        %v811 = vadd.f32 %v801, %v809
        %s812 = sld [smem:[#allocation3 + $0x18]]
        %v813 = vstv %s812
        %v814 = vmul.f32 %v813, %v356
        %816 = vrot.lane.b32.xlu0 %v814, 80
        %v817 = vpop.permute.xlu0 %816
        %v818 = vrot.slane %v817, 1
        %v819 = vsel %vm406, %v817, %v818
        %v821 = vadd.f32 %v811, %v819
        %s822 = sld [smem:[#allocation3 + $0x49]]
        %v823 = vstv %s822
        %v824 = vmul.f32 %v823, %v368
        %826 = vrot.lane.b32.xlu0 %v824, 80
        %v827 = vpop.permute.xlu0 %826
        %v828 = vrot.slane %v827, 1
        %v829 = vsel %vm406, %v827, %v828
        %v831 = vadd.f32 %v821, %v829
        %s832 = sld [smem:[#allocation3 + $0x1f]]
        %v833 = vstv %s832
        %v834 = vmul.f32 %v833, %v356
        %836 = vrot.lane.b32.xlu0 %v834, 64
        %v837 = vpop.permute.xlu0 %836
        %v838 = vrot.slane %v837, 1
        %v839 = vsel %vm427, %v837, %v838
        %v841 = vadd.f32 %v831, %v839
        %s842 = sld [smem:[#allocation3 + $0x50]]
        %v843 = vstv %s842
        %v844 = vmul.f32 %v843, %v368
        %846 = vrot.lane.b32.xlu0 %v844, 64
        %v847 = vpop.permute.xlu0 %846
        %v848 = vrot.slane %v847, 1
        %v849 = vsel %vm427, %v847, %v848
        %v851 = vadd.f32 %v841, %v849
        %s852 = sld [smem:[#allocation3 + $0x26]]
        %v853 = vstv %s852
        %v854 = vmul.f32 %v853, %v356
        %856 = vrot.lane.b32.xlu0 %v854, 48
        %v857 = vpop.permute.xlu0 %856
        %v858 = vrot.slane %v857, 1
        %v859 = vsel %vm448, %v857, %v858
        %v861 = vadd.f32 %v851, %v859
        %s862 = sld [smem:[#allocation3 + $0x57]]
        %v863 = vstv %s862
        %v864 = vmul.f32 %v863, %v368
        %866 = vrot.lane.b32.xlu0 %v864, 48
        %v867 = vpop.permute.xlu0 %866
        %v868 = vrot.slane %v867, 1
        %v869 = vsel %vm448, %v867, %v868
        %v871 = vadd.f32 %v861, %v869
        %s872 = sld [smem:[#allocation3 + $0x2d]]
        %v873 = vstv %s872
        %v874 = vmul.f32 %v873, %v356
        %876 = vrot.lane.b32.xlu0 %v874, 32
        %v877 = vpop.permute.xlu0 %876
        %v878 = vrot.slane %v877, 1
        %v879 = vsel %vm469, %v877, %v878
        %v881 = vadd.f32 %v871, %v879
        %s882 = sld [smem:[#allocation3 + $0x5e]]
        %v883 = vstv %s882
        %v884 = vmul.f32 %v883, %v368
        %886 = vrot.lane.b32.xlu0 %v884, 32
        %v887 = vpop.permute.xlu0 %886
        %v888 = vrot.slane %v887, 1
        %v889 = vsel %vm469, %v887, %v888
        %v891 = vadd.f32 %v881, %v889
        %893 = vrot.lane.b32.xlu0 %v891, 125
        %v894 = vpop.permute.xlu0 %893
        %v895 = vrot.slane %v894, 1
        %vm896 = vcmask 1022976
        %v897 = vsel %vm896, %v894, %v895
        %v899 = vadd.f32 %v763, %v897
        %s900 = sld [smem:[#allocation3 + $0x4]]
        %v901 = vstv %s900
        %v902 = vmul.f32 %v901, %v356
        %v903 = vadd.f32 %v902, 0.0
        %s904 = sld [smem:[#allocation3 + $0x35]]
        %v905 = vstv %s904
        %v906 = vmul.f32 %v905, %v368
        %v907 = vadd.f32 %v903, %v906
        %s908 = sld [smem:[#allocation3 + $0xb]]
        %v909 = vstv %s908
        %v910 = vmul.f32 %v909, %v356
        %912 = vrot.lane.b32.xlu0 %v910, 112
        %v913 = vpop.permute.xlu0 %912
        %v914 = vrot.slane %v913, 1
        %v915 = vsel %vm363, %v913, %v914
        %v917 = vadd.f32 %v907, %v915
        %s918 = sld [smem:[#allocation3 + $0x3c]]
        %v919 = vstv %s918
        %v920 = vmul.f32 %v919, %v368
        %922 = vrot.lane.b32.xlu0 %v920, 112
        %v923 = vpop.permute.xlu0 %922
        %v924 = vrot.slane %v923, 1
        %v925 = vsel %vm363, %v923, %v924
        %v927 = vadd.f32 %v917, %v925
        %s928 = sld [smem:[#allocation3 + $0x12]]
        %v929 = vstv %s928
        %v930 = vmul.f32 %v929, %v356
        %932 = vrot.lane.b32.xlu0 %v930, 96
        %v933 = vpop.permute.xlu0 %932
        %v934 = vrot.slane %v933, 1
        %v935 = vsel %vm385, %v933, %v934
        %v937 = vadd.f32 %v927, %v935
        %s938 = sld [smem:[#allocation3 + $0x43]]
        %v939 = vstv %s938
        %v940 = vmul.f32 %v939, %v368
        %942 = vrot.lane.b32.xlu0 %v940, 96
        %v943 = vpop.permute.xlu0 %942
        %v944 = vrot.slane %v943, 1
        %v945 = vsel %vm385, %v943, %v944
        %v947 = vadd.f32 %v937, %v945
        %s948 = sld [smem:[#allocation3 + $0x19]]
        %v949 = vstv %s948
        %v950 = vmul.f32 %v949, %v356
        %952 = vrot.lane.b32.xlu0 %v950, 80
        %v953 = vpop.permute.xlu0 %952
        %v954 = vrot.slane %v953, 1
        %v955 = vsel %vm406, %v953, %v954
        %v957 = vadd.f32 %v947, %v955
        %s958 = sld [smem:[#allocation3 + $0x4a]]
        %v959 = vstv %s958
        %v960 = vmul.f32 %v959, %v368
        %962 = vrot.lane.b32.xlu0 %v960, 80
        %v963 = vpop.permute.xlu0 %962
        %v964 = vrot.slane %v963, 1
        %v965 = vsel %vm406, %v963, %v964
        %v967 = vadd.f32 %v957, %v965
        %s968 = sld [smem:[#allocation3 + $0x20]]
        %v969 = vstv %s968
        %v970 = vmul.f32 %v969, %v356
        %972 = vrot.lane.b32.xlu0 %v970, 64
        %v973 = vpop.permute.xlu0 %972
        %v974 = vrot.slane %v973, 1
        %v975 = vsel %vm427, %v973, %v974
        %v977 = vadd.f32 %v967, %v975
        %s978 = sld [smem:[#allocation3 + $0x51]]
        %v979 = vstv %s978
        %v980 = vmul.f32 %v979, %v368
        %982 = vrot.lane.b32.xlu0 %v980, 64
        %v983 = vpop.permute.xlu0 %982
        %v984 = vrot.slane %v983, 1
        %v985 = vsel %vm427, %v983, %v984
        %v987 = vadd.f32 %v977, %v985
        %s988 = sld [smem:[#allocation3 + $0x27]]
        %v989 = vstv %s988
        %v990 = vmul.f32 %v989, %v356
        %992 = vrot.lane.b32.xlu0 %v990, 48
        %v993 = vpop.permute.xlu0 %992
        %v994 = vrot.slane %v993, 1
        %v995 = vsel %vm448, %v993, %v994
        %v997 = vadd.f32 %v987, %v995
        %s998 = sld [smem:[#allocation3 + $0x58]]
        %v999 = vstv %s998
        %v1000 = vmul.f32 %v999, %v368
        %1002 = vrot.lane.b32.xlu0 %v1000, 48
        %v1003 = vpop.permute.xlu0 %1002
        %v1004 = vrot.slane %v1003, 1
        %v1005 = vsel %vm448, %v1003, %v1004
        %v1007 = vadd.f32 %v997, %v1005
        %s1008 = sld [smem:[#allocation3 + $0x2e]]
        %v1009 = vstv %s1008
        %v1010 = vmul.f32 %v1009, %v356
        %1012 = vrot.lane.b32.xlu0 %v1010, 32
        %v1013 = vpop.permute.xlu0 %1012
        %v1014 = vrot.slane %v1013, 1
        %v1015 = vsel %vm469, %v1013, %v1014
        %v1017 = vadd.f32 %v1007, %v1015
        %s1018 = sld [smem:[#allocation3 + $0x5f]]
        %v1019 = vstv %s1018
        %v1020 = vmul.f32 %v1019, %v368
        %1022 = vrot.lane.b32.xlu0 %v1020, 32
        %v1023 = vpop.permute.xlu0 %1022
        %v1024 = vrot.slane %v1023, 1
        %v1025 = vsel %vm469, %v1023, %v1024
        %v1027 = vadd.f32 %v1017, %v1025
        %s1028 = scalar_lea.vmem [#allocation9], 4
        %v1029 = vld [vmem:[%s1028] ss:$8 sm:$0x3]
        %1031 = vrot.lane.b32.xlu0 %v1027, 124
        %v1032 = vpop.permute.xlu0 %1031
        %v1033 = vrot.slane %v1032, 1
        %vm1034 = vcmask 1014784
        %v1035 = vsel %vm1034, %v1032, %v1033
        %v1037 = vmul.f32 %v1029, %v1035
        %v1038 = vadd.f32 %v899, %v1037
        %s1039 = sld [smem:[#allocation3 + $0x5]]
        %v1040 = vstv %s1039
        %v1041 = vmul.f32 %v1040, %v356
        %v1042 = vadd.f32 %v1041, 0.0
        %s1043 = sld [smem:[#allocation3 + $0x36]]
        %v1044 = vstv %s1043
        %v1045 = vmul.f32 %v1044, %v368
        %v1046 = vadd.f32 %v1042, %v1045
        %s1047 = sld [smem:[#allocation3 + $0xc]]
        %v1048 = vstv %s1047
        %v1049 = vmul.f32 %v1048, %v356
        %1051 = vrot.lane.b32.xlu0 %v1049, 112
        %v1052 = vpop.permute.xlu0 %1051
        %v1053 = vrot.slane %v1052, 1
        %v1054 = vsel %vm363, %v1052, %v1053
        %v1056 = vadd.f32 %v1046, %v1054
        %s1057 = sld [smem:[#allocation3 + $0x3d]]
        %v1058 = vstv %s1057
        %v1059 = vmul.f32 %v1058, %v368
        %1061 = vrot.lane.b32.xlu0 %v1059, 112
        %v1062 = vpop.permute.xlu0 %1061
        %v1063 = vrot.slane %v1062, 1
        %v1064 = vsel %vm363, %v1062, %v1063
        %v1066 = vadd.f32 %v1056, %v1064
        %s1067 = sld [smem:[#allocation3 + $0x13]]
        %v1068 = vstv %s1067
        %v1069 = vmul.f32 %v1068, %v356
        %1071 = vrot.lane.b32.xlu0 %v1069, 96
        %v1072 = vpop.permute.xlu0 %1071
        %v1073 = vrot.slane %v1072, 1
        %v1074 = vsel %vm385, %v1072, %v1073
        %v1076 = vadd.f32 %v1066, %v1074
        %s1077 = sld [smem:[#allocation3 + $0x44]]
        %v1078 = vstv %s1077
        %v1079 = vmul.f32 %v1078, %v368
        %1081 = vrot.lane.b32.xlu0 %v1079, 96
        %v1082 = vpop.permute.xlu0 %1081
        %v1083 = vrot.slane %v1082, 1
        %v1084 = vsel %vm385, %v1082, %v1083
        %v1086 = vadd.f32 %v1076, %v1084
        %s1087 = sld [smem:[#allocation3 + $0x1a]]
        %v1088 = vstv %s1087
        %v1089 = vmul.f32 %v1088, %v356
        %1091 = vrot.lane.b32.xlu0 %v1089, 80
        %v1092 = vpop.permute.xlu0 %1091
        %v1093 = vrot.slane %v1092, 1
        %v1094 = vsel %vm406, %v1092, %v1093
        %v1096 = vadd.f32 %v1086, %v1094
        %s1097 = sld [smem:[#allocation3 + $0x4b]]
        %v1098 = vstv %s1097
        %v1099 = vmul.f32 %v1098, %v368
        %1101 = vrot.lane.b32.xlu0 %v1099, 80
        %v1102 = vpop.permute.xlu0 %1101
        %v1103 = vrot.slane %v1102, 1
        %v1104 = vsel %vm406, %v1102, %v1103
        %v1106 = vadd.f32 %v1096, %v1104
        %s1107 = sld [smem:[#allocation3 + $0x21]]
        %v1108 = vstv %s1107
        %v1109 = vmul.f32 %v1108, %v356
        %1111 = vrot.lane.b32.xlu0 %v1109, 64
        %v1112 = vpop.permute.xlu0 %1111
        %v1113 = vrot.slane %v1112, 1
        %v1114 = vsel %vm427, %v1112, %v1113
        %v1116 = vadd.f32 %v1106, %v1114
        %s1117 = sld [smem:[#allocation3 + $0x52]]
        %v1118 = vstv %s1117
        %v1119 = vmul.f32 %v1118, %v368
        %1121 = vrot.lane.b32.xlu0 %v1119, 64
        %v1122 = vpop.permute.xlu0 %1121
        %v1123 = vrot.slane %v1122, 1
        %v1124 = vsel %vm427, %v1122, %v1123
        %v1126 = vadd.f32 %v1116, %v1124
        %s1127 = sld [smem:[#allocation3 + $0x28]]
        %v1128 = vstv %s1127
        %v1129 = vmul.f32 %v1128, %v356
        %1131 = vrot.lane.b32.xlu0 %v1129, 48
        %v1132 = vpop.permute.xlu0 %1131
        %v1133 = vrot.slane %v1132, 1
        %v1134 = vsel %vm448, %v1132, %v1133
        %v1136 = vadd.f32 %v1126, %v1134
        %s1137 = sld [smem:[#allocation3 + $0x59]]
        %v1138 = vstv %s1137
        %v1139 = vmul.f32 %v1138, %v368
        %1141 = vrot.lane.b32.xlu0 %v1139, 48
        %v1142 = vpop.permute.xlu0 %1141
        %v1143 = vrot.slane %v1142, 1
        %v1144 = vsel %vm448, %v1142, %v1143
        %v1146 = vadd.f32 %v1136, %v1144
        %s1147 = sld [smem:[#allocation3 + $0x2f]]
        %v1148 = vstv %s1147
        %v1149 = vmul.f32 %v1148, %v356
        %1151 = vrot.lane.b32.xlu0 %v1149, 32
        %v1152 = vpop.permute.xlu0 %1151
        %v1153 = vrot.slane %v1152, 1
        %v1154 = vsel %vm469, %v1152, %v1153
        %v1156 = vadd.f32 %v1146, %v1154
        %s1157 = sld [smem:[#allocation3 + $0x60]]
        %v1158 = vstv %s1157
        %v1159 = vmul.f32 %v1158, %v368
        %1161 = vrot.lane.b32.xlu0 %v1159, 32
        %v1162 = vpop.permute.xlu0 %1161
        %v1163 = vrot.slane %v1162, 1
        %v1164 = vsel %vm469, %v1162, %v1163
        %v1166 = vadd.f32 %v1156, %v1164
        %s1167 = scalar_lea.vmem [#allocation9], 5
        %v1168 = vld [vmem:[%s1167] ss:$8 sm:$0x3]
        %1170 = vrot.lane.b32.xlu0 %v1166, 123
        %v1171 = vpop.permute.xlu0 %1170
        %v1172 = vrot.slane %v1171, 1
        %vm1173 = vcmask 1006592
        %v1174 = vsel %vm1173, %v1171, %v1172
        %v1176 = vmul.f32 %v1168, %v1174
        %v1177 = vadd.f32 %v1038, %v1176
        %s1178 = sld [smem:[#allocation3 + $0x6]]
        %v1179 = vstv %s1178
        %v1180 = vmul.f32 %v1179, %v356
        %v1181 = vadd.f32 %v1180, 0.0
        %s1182 = sld [smem:[#allocation3 + $0x37]]
        %v1183 = vstv %s1182
        %v1184 = vmul.f32 %v1183, %v368
        %v1185 = vadd.f32 %v1181, %v1184
        %s1186 = sld [smem:[#allocation3 + $0xd]]
        %v1187 = vstv %s1186
        %v1188 = vmul.f32 %v1187, %v356
        %1190 = vrot.lane.b32.xlu0 %v1188, 112
        %v1191 = vpop.permute.xlu0 %1190
        %v1192 = vrot.slane %v1191, 1
        %v1193 = vsel %vm363, %v1191, %v1192
        %v1195 = vadd.f32 %v1185, %v1193
        %s1196 = sld [smem:[#allocation3 + $0x3e]]
        %v1197 = vstv %s1196
        %v1198 = vmul.f32 %v1197, %v368
        %1200 = vrot.lane.b32.xlu0 %v1198, 112
        %v1201 = vpop.permute.xlu0 %1200
        %v1202 = vrot.slane %v1201, 1
        %v1203 = vsel %vm363, %v1201, %v1202
        %v1205 = vadd.f32 %v1195, %v1203
        %s1206 = sld [smem:[#allocation3 + $0x14]]
        %v1207 = vstv %s1206
        %v1208 = vmul.f32 %v1207, %v356
        %1210 = vrot.lane.b32.xlu0 %v1208, 96
        %v1211 = vpop.permute.xlu0 %1210
        %v1212 = vrot.slane %v1211, 1
        %v1213 = vsel %vm385, %v1211, %v1212
        %v1215 = vadd.f32 %v1205, %v1213
        %s1216 = sld [smem:[#allocation3 + $0x45]]
        %v1217 = vstv %s1216
        %v1218 = vmul.f32 %v1217, %v368
        %1220 = vrot.lane.b32.xlu0 %v1218, 96
        %v1221 = vpop.permute.xlu0 %1220
        %v1222 = vrot.slane %v1221, 1
        %v1223 = vsel %vm385, %v1221, %v1222
        %v1225 = vadd.f32 %v1215, %v1223
        %s1226 = sld [smem:[#allocation3 + $0x1b]]
        %v1227 = vstv %s1226
        %v1228 = vmul.f32 %v1227, %v356
        %1230 = vrot.lane.b32.xlu0 %v1228, 80
        %v1231 = vpop.permute.xlu0 %1230
        %v1232 = vrot.slane %v1231, 1
        %v1233 = vsel %vm406, %v1231, %v1232
        %v1235 = vadd.f32 %v1225, %v1233
        %s1236 = sld [smem:[#allocation3 + $0x4c]]
        %v1237 = vstv %s1236
        %v1238 = vmul.f32 %v1237, %v368
        %1240 = vrot.lane.b32.xlu0 %v1238, 80
        %v1241 = vpop.permute.xlu0 %1240
        %v1242 = vrot.slane %v1241, 1
        %v1243 = vsel %vm406, %v1241, %v1242
        %v1245 = vadd.f32 %v1235, %v1243
        %s1246 = sld [smem:[#allocation3 + $0x22]]
        %v1247 = vstv %s1246
        %v1248 = vmul.f32 %v1247, %v356
        %1250 = vrot.lane.b32.xlu0 %v1248, 64
        %v1251 = vpop.permute.xlu0 %1250
        %v1252 = vrot.slane %v1251, 1
        %v1253 = vsel %vm427, %v1251, %v1252
        %v1255 = vadd.f32 %v1245, %v1253
        %s1256 = sld [smem:[#allocation3 + $0x53]]
        %v1257 = vstv %s1256
        %v1258 = vmul.f32 %v1257, %v368
        %1260 = vrot.lane.b32.xlu0 %v1258, 64
        %v1261 = vpop.permute.xlu0 %1260
        %v1262 = vrot.slane %v1261, 1
        %v1263 = vsel %vm427, %v1261, %v1262
        %v1265 = vadd.f32 %v1255, %v1263
        %s1266 = sld [smem:[#allocation3 + $0x29]]
        %v1267 = vstv %s1266
        %v1268 = vmul.f32 %v1267, %v356
        %1270 = vrot.lane.b32.xlu0 %v1268, 48
        %v1271 = vpop.permute.xlu0 %1270
        %v1272 = vrot.slane %v1271, 1
        %v1273 = vsel %vm448, %v1271, %v1272
        %v1275 = vadd.f32 %v1265, %v1273
        %s1276 = sld [smem:[#allocation3 + $0x5a]]
        %v1277 = vstv %s1276
        %v1278 = vmul.f32 %v1277, %v368
        %1280 = vrot.lane.b32.xlu0 %v1278, 48
        %v1281 = vpop.permute.xlu0 %1280
        %v1282 = vrot.slane %v1281, 1
        %v1283 = vsel %vm448, %v1281, %v1282
        %v1285 = vadd.f32 %v1275, %v1283
        %s1286 = sld [smem:[#allocation3 + $0x30]]
        %v1287 = vstv %s1286
        %v1288 = vmul.f32 %v1287, %v356
        %1290 = vrot.lane.b32.xlu0 %v1288, 32
        %v1291 = vpop.permute.xlu0 %1290
        %v1292 = vrot.slane %v1291, 1
        %v1293 = vsel %vm469, %v1291, %v1292
        %v1295 = vadd.f32 %v1285, %v1293
        %s1296 = sld [smem:[#allocation3 + $0x61]]
        %v1297 = vstv %s1296
        %v1298 = vmul.f32 %v1297, %v368
        %1300 = vrot.lane.b32.xlu0 %v1298, 32
        %v1301 = vpop.permute.xlu0 %1300
        %v1302 = vrot.slane %v1301, 1
        %v1303 = vsel %vm469, %v1301, %v1302
        %v1305 = vadd.f32 %v1295, %v1303
        %s1306 = scalar_lea.vmem [#allocation9], 6
        %v1307 = vld [vmem:[%s1306] ss:$8 sm:$0x3]
        %1309 = vrot.lane.b32.xlu0 %v1305, 122
        %v1310 = vpop.permute.xlu0 %1309
        %v1311 = vrot.slane %v1310, 1
        %vm1312 = vcmask 998400
        %v1313 = vsel %vm1312, %v1310, %v1311
        %v1315 = vmul.f32 %v1307, %v1313
        %v1316 = vadd.f32 %v1177, %v1315
        %s1317 = sld [smem:[#allocation8]]
        %v1318 = vstv %s1317
        %v1319 = vmul.f32 %v1316, %v1318
        %s1320 = sld [smem:[#allocation8 + $0x1]]
        %v1321 = vstv %s1320
        %v1322 = vadd.f32 %v1319, %v1321
        %v1323 = vxor.u32 %v1322, 2147483648
        %v1324 = vmul.f32 %v1323, 1.442695
        %v1325 = vpow.pop %v1324
        %v1326 = vadd.f32 %v1325, 1.0
        %v1327 = vrcp.pop %v1326
        %v1328 = vmul.f32 1.0, %v1327
        %v1330 = vlaneseq
        %v1331 = vshrl.u32 %v1330, 7
        %v1332 = vsub.s32 0, %v1331
        %v1333 = vrot.slane %v1328, %v1332
        %v1334 = vlaneseq
        %v1335 = vshrl.u32 %v1334, 7
        %v1336 = vsub.s32 1, %v1335
        %v1337 = vrot.slane %v1328, %v1336
        %v1338 = vcombine.low %v1333, %v1337
        %v1340 = vmul.f32 %v252, %v1338
        %1341 = vst [vmem:[%s251] sm:$0xff] %v1340
        %s1342 = sand.u32 %s121, 1
        %s1343 = scalar_lea.sflag [#allocation5], %s1342
        %s1344 = sand.u32 %s121, 1
        %s1345 = smul.addr %s1344, 8
        %s1346 = scalar_lea.vmem [#allocation12], %s1345
        // Predicated region
        $region53: #{tpu_custom_call.1} parent=35 // pred_check
          %p1347 = pneg %p131
        $region54: #{tpu_custom_call.1} parent=35 // pred_check_branch
          %1349 = sbr.rel (%p1347) target = $region56
        $region55: #{tpu_custom_call.1} parent=35 // pred_region
          %s1351 = ssub.s32 128, 128
          %1352 = vsyncadd %s1343, %s1351
          %s1353 = smul.addr %s24, 2
          %s1354 = smul.addr %s1353, 64
          %s1355 = scalar_lea.hbm %s4, %s1354
          %s1357 = sshll.u32 %s1346, 4
          %s1358 = int_to_ptr.vmem [resolvable:$true] %s1357
          %1360 = dma.vmem_to_hbm [thread:$0]  %s1358, 128, %s1355, %s1343
        $region56: #{tpu_custom_call.1} parent=35 // pred_fallthru
          _
      $region36: #{tpu_custom_call.1} parent=5 // pred_fallthru
        _
      %p1361 = scmp.le.s32.totalorder 2, %s19
      // Predicated region
      $region57: #{tpu_custom_call.1} parent=5 // pred_check
        %p1362 = pneg %p1361
      $region58: #{tpu_custom_call.1} parent=5 // pred_check_branch
        %1364 = sbr.rel (%p1362) target = $region60
      $region59: #{tpu_custom_call.1} parent=5 // pred_region
        %s1365 = ssub.s32 %s19, 2
        // Predicated region
        $region61: #{tpu_custom_call.1} parent=59 // pred_check
          %p1366 = pneg %p137
        $region62: #{tpu_custom_call.1} parent=59 // pred_check_branch
          %1368 = sbr.rel (%p1366) target = $region64
        $region63: #{tpu_custom_call.1} parent=59 // pred_region
          %s1369 = sand.u32 %s122, 1
          %s1370 = scalar_lea.sflag [#allocation5], %s1369
          %s1371 = sand.u32 %s122, 1
          %s1372 = smul.addr %s1371, 8
          %s1373 = scalar_lea.vmem [#allocation12], %s1372
          %1374 = dma.done %s1370, 128
        $region64: #{tpu_custom_call.1} parent=59 // pred_fallthru
          _
      $region60: #{tpu_custom_call.1} parent=5 // pred_fallthru
        _
    $region6: #{tpu_custom_call.1} parent=1 // loop_footer
      %s23 = sadd.s32 1, %s19
    $region7: #{tpu_custom_call.1} parent=1 // loop_footer_branch
      %18 = sbr.rel target = $region3
    $region8: #{tpu_custom_call.1} parent=1 // loop_exit
      _
    %1375 = vsyncpa [#allocation4], 1
    %s1376 = scalar_lea.sflag [#allocation4], 1
    %1377 = vsyncpa %s1376, 1
    %1378 = vsyncpa [#allocation11], 1
    %s1379 = scalar_lea.sflag [#allocation11], 1
    %1380 = vsyncpa %s1379, 1
    %1381 = vsyncpa [#allocation5], 1
    %s1382 = scalar_lea.sflag [#allocation5], 1
    %1383 = vsyncpa %s1382, 1
    %1384 = vsyncpa [#allocation6], 1
    %s1385 = scalar_lea.sflag [#allocation6], 1
    %1386 = vsyncpa %s1385, 1
    %1387 = vsyncpa [#allocation7], 1
    %s1388 = scalar_lea.sflag [#allocation7], 1
    %1389 = vsyncpa %s1388, 1

</llo_original>
